<compile_context>
chip_gen: v6e
topology: v6e:2x2x1
jax: 0.10.0
libtpu: 0.0.40
codegen_flags: <defaults>
</compile_context>

<pallas_src>
import functools

import jax
import jax.numpy as jnp
from jax.experimental import pallas as pl
from jax.experimental.pallas import tpu as pltpu

BN_EPS = 1e-5
COMMITMENT_COST = 0.25

_CPARAMS = pltpu.CompilerParams(
    dimension_semantics=("arbitrary",),
    vmem_limit_bytes=48 * 1024 * 1024,   # <= v7x 64 MiB physical VMEM
)


# ----------------------------- Pallas kernels ------------------------------

def _conv_bn_relu_kernel(p_ref, w_ref, g_ref, b_ref, o_ref, *, pool):
    """Fused ConvBlock for the whole batch in one MXU matmul.

    p_ref: (K9p, L)  bf16 im2col patches (ones row folds bias, zero-padded rows)
    w_ref: (Cout, K9p) bf16 flattened conv weight (+bias column, zero-padded)
    g_ref/b_ref: (Cout, 1) f32 BatchNorm gamma / beta
    o_ref: (Cout, Lout) conv->BN->ReLU[->2x2 maxpool] output (bf16 or f32)

    L = N*H*W.  If pool, the lanes of p_ref are phase-ordered (four contiguous
    2x2-pooling phases of Q = L//4 lanes each) and Lout = Q; otherwise Lout = L.
    """
    y = jnp.dot(w_ref[...], p_ref[...], preferred_element_type=jnp.float32)
    # BatchNorm batch statistics over the full (N, H, W) extent (lane axis),
    # centered form (avoids E[x^2]-E[x]^2 cancellation).
    mean = jnp.mean(y, axis=1, keepdims=True)
    c = y - mean
    var = jnp.mean(c * c, axis=1, keepdims=True)
    scale = g_ref[...] * jax.lax.rsqrt(var + BN_EPS)
    a = jnp.maximum(c * scale + b_ref[...], 0.0)
    if pool:
        q = o_ref.shape[1]          # Q = N*Ho*Wo, a multiple of 128 here
        a = jnp.maximum(jnp.maximum(a[:, 0 * q:1 * q], a[:, 1 * q:2 * q]),
                        jnp.maximum(a[:, 2 * q:3 * q], a[:, 3 * q:4 * q]))
    o_ref[...] = a.astype(o_ref.dtype)


def _conv_sigmoid_kernel(p_ref, w_ref, o_ref):
    """Final decoder conv (bias folded in) + sigmoid epilogue, whole batch."""
    y = jnp.dot(w_ref[...], p_ref[...], preferred_element_type=jnp.float32)
    o_ref[...] = jax.nn.sigmoid(y)


def _vq_kernel(z_ref, e_ref, q_ref, loss_ref):
    """Vector quantization for the whole batch of latent columns.

    z_ref: (D, L) f32 latents (columns = batch*spatial positions)
    e_ref: (K, D) f32 codebook
    q_ref: (D, L) quantized latents (straight-through forward value)
    loss_ref: (1, 1) SMEM: sum of squared differences (quantized - latent)
    """
    z = z_ref[...]
    e = e_ref[...]
    n_emb = e.shape[0]
    n_cols = z.shape[1]
    ez = jnp.dot(e, z, preferred_element_type=jnp.float32)           # (K, L)
    z2 = jnp.sum(z * z, axis=0, keepdims=True)                       # (1, L)
    e2 = jnp.sum(e * e, axis=1, keepdims=True)                       # (K, 1)
    d = z2 + e2 - 2.0 * ez                                           # (K, L)
    iota_k = jax.lax.broadcasted_iota(jnp.int32, (n_emb, n_cols), 0)
    dmin = jnp.min(d, axis=0, keepdims=True)
    # first-minimum tie break (matches torch.argmin)
    idx = jnp.min(jnp.where(d == dmin, iota_k, n_emb), axis=0, keepdims=True)
    onehot = (iota_k == idx).astype(jnp.float32)                     # (K, L)
    q = jax.lax.dot_general(e, onehot, (((0,), (0,)), ((), ())),
                            preferred_element_type=jnp.float32)      # (D, L)
    q_ref[...] = q.astype(q_ref.dtype)
    diff = q - z
    loss_ref[0, 0] = jnp.sum(diff * diff)


# ------------------------------ XLA glue (data movement only) ----------------

def _round_up(n, m):
    return (n + m - 1) // m * m


def _im2col(x, n_batch, h, w, phase_order):
    """x: (C, N*H*W), columns n-major / row-major (h, w).

    Returns bf16 patches (K9p, N*H*W): 9 shifted taps per channel, a ones row
    (bias fold), zero rows padding K9 = 9*C+1 up to a multiple of 16.  If
    phase_order, lanes are regrouped so the four 2x2-pooling phases occupy four
    contiguous blocks of Q = N*(H//2)*(W//2) lanes (each a 128-multiple here).
    """
    c = x.shape[0]
    xi = x.reshape(c, n_batch, h, w)
    xp = jnp.pad(xi, ((0, 0), (0, 0), (1, 1), (1, 1)))
    taps = [xp[:, :, ky:ky + h, kx:kx + w] for ky in range(3) for kx in range(3)]
    p = jnp.concatenate(taps, axis=0)                       # (9C, N, H, W)
    if phase_order:
        p = p.reshape(9 * c, n_batch, h // 2, 2, w // 2, 2)  # (9C,N,Ho,dy,Wo,dx)
        p = p.transpose(0, 3, 5, 1, 2, 4)                    # (9C,dy,dx,N,Ho,Wo)
    p = p.reshape(9 * c, n_batch * h * w)
    ones = jnp.ones((1, n_batch * h * w), p.dtype)
    p = jnp.concatenate([p, ones], axis=0)
    k9 = 9 * c + 1
    k9p = _round_up(k9, 16)
    if k9p > k9:
        p = jnp.pad(p, ((0, k9p - k9), (0, 0)))
    return p.astype(jnp.bfloat16)


def _flatten_weight(w, b, k9p):
    """w: (Cout, Cin, 3, 3) torch layout, b: (Cout,) -> bf16 (Cout, K9p)."""
    cout, cin = w.shape[0], w.shape[1]
    wf = jnp.transpose(w, (0, 2, 3, 1)).reshape(cout, 9 * cin)
    wf = jnp.concatenate([wf, b.reshape(cout, 1)], axis=1)
    wf = jnp.pad(wf, ((0, 0), (0, k9p - (9 * cin + 1))))
    return wf.astype(jnp.bfloat16)


def upsample_nearest_2x(x, n_batch, h, w):
    """nn.Upsample(scale_factor=2, mode='nearest') on (C, N*H*W) layout."""
    c = x.shape[0]
    xi = x.reshape(c, n_batch, h, w)
    xi = jnp.broadcast_to(xi[:, :, :, None, :, None], (c, n_batch, h, 2, w, 2))
    return xi.reshape(c, n_batch * 4 * h * w), 2 * h, 2 * w


# ------------------------------ layer wrappers ------------------------------

def conv_block(x, p, n_batch, h, w, pool, out_dtype=jnp.bfloat16):
    """ConvBlock = conv3x3(pad=1) -> BatchNorm (batch stats) -> ReLU [-> MaxPool2d(2)].

    x: (Cin, N*H*W).  Returns ((Cout, N*Ho*Wo), Ho, Wo)."""
    cout = p["w"].shape[0]
    l = n_batch * h * w
    patches = _im2col(x, n_batch, h, w, phase_order=pool)
    k9p = patches.shape[0]
    wflat = _flatten_weight(p["w"], p["b"], k9p)
    lout = l // 4 if pool else l
    gamma = p["gamma"].reshape(cout, 1).astype(jnp.float32)
    beta = p["beta"].reshape(cout, 1).astype(jnp.float32)
    out_bytes = jnp.dtype(out_dtype).itemsize
    cost = pl.CostEstimate(
        flops=2 * cout * k9p * l + 8 * cout * l,
        transcendentals=cout,
        bytes_accessed=2 * k9p * l + 2 * cout * k9p + 8 * cout + out_bytes * cout * lout)
    y = pl.pallas_call(
        functools.partial(_conv_bn_relu_kernel, pool=pool),
        out_shape=jax.ShapeDtypeStruct((cout, lout), out_dtype),
        grid=(1,),
        in_specs=[pl.BlockSpec((k9p, l), lambda i: (0, 0)),
                  pl.BlockSpec((cout, k9p), lambda i: (0, 0)),
                  pl.BlockSpec((cout, 1), lambda i: (0, 0)),
                  pl.BlockSpec((cout, 1), lambda i: (0, 0))],
        out_specs=pl.BlockSpec((cout, lout), lambda i: (0, 0)),
        compiler_params=_CPARAMS,
        cost_estimate=cost,
    )(patches, wflat, gamma, beta)
    if pool:
        return y, h // 2, w // 2
    return y, h, w


def vector_quantize(z, emb):
    """z: (D, L) f32 latents; emb: (K, D).  Returns (quantized bf16 (D, L), vq_loss)."""
    d, l = z.shape
    k = emb.shape[0]
    emb = emb.astype(jnp.float32)
    cost = pl.CostEstimate(
        flops=2 * k * d * l + 2 * k * d * l + 6 * k * l,
        transcendentals=0,
        bytes_accessed=4 * d * l + 4 * k * d + 2 * d * l + 4)
    q, loss = pl.pallas_call(
        _vq_kernel,
        out_shape=(jax.ShapeDtypeStruct((d, l), jnp.bfloat16),
                   jax.ShapeDtypeStruct((1, 1), jnp.float32)),
        grid=(1,),
        in_specs=[pl.BlockSpec((d, l), lambda i: (0, 0)),
                  pl.BlockSpec((k, d), lambda i: (0, 0))],
        out_specs=(pl.BlockSpec((d, l), lambda i: (0, 0)),
                   pl.BlockSpec((1, 1), lambda i: (0, 0),
                                memory_space=pltpu.MemorySpace.SMEM)),
        compiler_params=_CPARAMS,
        cost_estimate=cost,
    )(z.astype(jnp.float32), emb)
    # codebook_loss + cost * commitment_loss (equal MSE values in the forward pass)
    # TODO(synk): forward-only; detach / straight-through gradient semantics are
    # not represented (autodiff through this kernel would not match PyTorch).
    vq_loss = (1.0 + COMMITMENT_COST) * loss[0, 0] / (l * d)
    return q, vq_loss


def conv_out(x, w, b, n_batch, h, w_sp):
    """Final decoder conv (bias, no BN) + sigmoid.  Output f32 (Cout, N*H*W)."""
    cout = w.shape[0]
    l = n_batch * h * w_sp
    patches = _im2col(x, n_batch, h, w_sp, phase_order=False)
    k9p = patches.shape[0]
    wflat = _flatten_weight(w, b, k9p)
    cost = pl.CostEstimate(
        flops=2 * cout * k9p * l,
        transcendentals=cout * l,
        bytes_accessed=2 * k9p * l + 2 * cout * k9p + 4 * cout * l)
    return pl.pallas_call(
        _conv_sigmoid_kernel,
        out_shape=jax.ShapeDtypeStruct((cout, l), jnp.float32),
        grid=(1,),
        in_specs=[pl.BlockSpec((k9p, l), lambda i: (0, 0)),
                  pl.BlockSpec((cout, k9p), lambda i: (0, 0))],
        out_specs=pl.BlockSpec((cout, l), lambda i: (0, 0)),
        compiler_params=_CPARAMS,
        cost_estimate=cost,
    )(patches, wflat)


# ------------------------------ full forward --------------------------------

def vqvae_forward(x_nchw, params):
    n, cin, h, w = x_nchw.shape
    # fold batch into the lane axis: (C, N*H*W), columns n-major, (h, w) row-major
    x = jnp.transpose(x_nchw, (1, 0, 2, 3)).reshape(cin, n * h * w)
    nd = len(params["enc_down"])
    # ---- Encoder: input_conv [-> pool -> conv]*nd -> latent_conv ----
    x, h, w = conv_block(x, params["enc_in"], n, h, w, pool=(nd >= 1))
    for i, p in enumerate(params["enc_down"]):
        x, h, w = conv_block(x, p, n, h, w, pool=(i < nd - 1))
    z, h, w = conv_block(x, params["enc_latent"], n, h, w, pool=False,
                         out_dtype=jnp.float32)
    # ---- VectorQuantizer ----
    q, vq_loss = vector_quantize(z, params["embedding"])
    # ---- Decoder: stem -> [upsample -> conv]*nd -> to_output -> sigmoid ----
    y, h, w = conv_block(q, params["dec_stem"], n, h, w, pool=False)
    for p in params["dec_up"]:
        y, h, w = upsample_nearest_2x(y, n, h, w)
        y, h, w = conv_block(y, p, n, h, w, pool=False)
    out = conv_out(y, params["out_w"], params["out_b"], n, h, w)
    out = out.reshape(-1, n, h, w).transpose(1, 0, 2, 3)        # back to NCHW
    return out, vq_loss


# ------------------------------ parameter init ------------------------------

def _init_conv(key, cin, cout):
    kw, kb = jax.random.split(key)
    bound = 1.0 / (cin * 9) ** 0.5
    w = jax.random.uniform(kw, (cout, cin, 3, 3), jnp.float32, -bound, bound)
    b = jax.random.uniform(kb, (cout,), jnp.float32, -bound, bound)
    return w, b


def _init_conv_block(key, cin, cout):
    w, b = _init_conv(key, cin, cout)
    return {"w": w, "b": b,
            "gamma": jnp.ones((cout,), jnp.float32),
            "beta": jnp.zeros((cout,), jnp.float32)}


def init_params(key, num_downsamplings, latent_channels, num_embeddings,
                channels, in_channels):
    channel_list = [channels * 2 ** i for i in range(num_downsamplings + 1)]
    rev = channel_list[::-1]
    n_keys = 5 + 2 * num_downsamplings
    keys = list(jax.random.split(key, n_keys))
    params = {}
    params["enc_in"] = _init_conv_block(keys.pop(), in_channels, channel_list[0])
    params["enc_down"] = [_init_conv_block(keys.pop(), ci, co)
                          for ci, co in zip(channel_list[:-1], channel_list[1:])]
    params["enc_latent"] = _init_conv_block(keys.pop(), channel_list[-1],
                                            latent_channels)
    params["embedding"] = jax.random.uniform(
        keys.pop(), (num_embeddings, latent_channels), jnp.float32,
        -1.0 / num_embeddings, 1.0 / num_embeddings)
    params["dec_stem"] = _init_conv_block(keys.pop(), latent_channels, rev[0])
    params["dec_up"] = [_init_conv_block(keys.pop(), ci, co)
                        for ci, co in zip(rev[:-1], rev[1:])]
    out_w, out_b = _init_conv(keys.pop(), rev[-1], in_channels)
    params["out_w"], params["out_b"] = out_w, out_b
    return params


# ---------------------------------- main -------------------------------------

if __name__ == "__main__":
    key = jax.random.PRNGKey(0)
    kp, kx = jax.random.split(key)

    num_downsamplings = 1
    latent_channels = 4
    num_embeddings = 16
    channels = 8
    in_channels = 3

    params = init_params(kp, num_downsamplings, latent_channels, num_embeddings,
                         channels, in_channels)
    x = jax.random.uniform(kx, (2, in_channels, 16, 16), jnp.float32)

    fwd = jax.jit(vqvae_forward)
    decoded, vq_loss = fwd(x, params)
    jax.block_until_ready((decoded, vq_loss))

    assert decoded.shape == (2, in_channels, 16, 16), decoded.shape
    assert decoded.dtype == jnp.float32
    assert vq_loss.shape == ()
    print("KERNEL_OK")
</pallas_src>

<mosaic_0001>
module attributes {stable_mosaic.version = 11 : i64} {
  func.func @_conv_bn_relu_kernel(%arg0: i32, %arg1: memref<32x512xbf16, #tpu.memory_space<vmem>>, %arg2: memref<8x32xbf16, #tpu.memory_space<vmem>>, %arg3: memref<8x1xf32, #tpu.memory_space<vmem>>, %arg4: memref<8x1xf32, #tpu.memory_space<vmem>>, %arg5: memref<8x128xbf16, #tpu.memory_space<vmem>>) attributes {dimension_semantics = [#tpu.dimension_semantics<arbitrary>], iteration_bounds = array<i64: 1>, scalar_prefetch = 0 : i64, scratch_operands = 0 : i64, tpu.core_type = #tpu.core_type<tc>, window_params = [{pipeline_mode = #tpu.pipeline_mode<synchronous>, transform_indices = @transform_0, window_bounds = array<i64: 32, 512>}, {pipeline_mode = #tpu.pipeline_mode<synchronous>, transform_indices = @transform_1, window_bounds = array<i64: 8, 32>}, {pipeline_mode = #tpu.pipeline_mode<synchronous>, transform_indices = @transform_2, window_bounds = array<i64: 8, 1>}, {pipeline_mode = #tpu.pipeline_mode<synchronous>, transform_indices = @transform_3, window_bounds = array<i64: 8, 1>}, {pipeline_mode = #tpu.pipeline_mode<synchronous>, transform_indices = @transform_4, window_bounds = array<i64: 8, 128>}]} {
    %c0 = arith.constant 0 : index
    %c0_0 = arith.constant 0 : index
    %0 = vector.load %arg2[%c0, %c0_0] : memref<8x32xbf16, #tpu.memory_space<vmem>>, vector<8x32xbf16>
    %c0_1 = arith.constant 0 : index
    %c0_2 = arith.constant 0 : index
    %1 = vector.load %arg1[%c0_1, %c0_2] : memref<32x512xbf16, #tpu.memory_space<vmem>>, vector<32x512xbf16>
    %cst = arith.constant dense<0.000000e+00> : vector<8x512xf32>
    %2 = tpu.matmul %0, %1, %cst {dimension_numbers = #tpu.dot_dimension_numbers<[1], [0], [0], [1], [0, 0, 1, 1], [], []>} : vector<8x32xbf16>, vector<32x512xbf16>, vector<8x512xf32> -> vector<8x512xf32>
    %cst_3 = arith.constant dense<0.000000e+00> : vector<8xf32>
    %3 = vector.multi_reduction <add>, %2, %cst_3 [1] : vector<8x512xf32> to vector<8xf32>
    %4 = vector.shape_cast %3 : vector<8xf32> to vector<8x1xf32>
    %cst_4 = arith.constant 5.120000e+02 : f32
    %5 = vector.broadcast %cst_4 : f32 to vector<8x1xf32>
    %6 = arith.divf %4, %5 : vector<8x1xf32>
    %7 = vector.broadcast %6 : vector<8x1xf32> to vector<8x512xf32>
    %8 = arith.subf %2, %7 : vector<8x512xf32>
    %9 = arith.mulf %8, %8 : vector<8x512xf32>
    %cst_5 = arith.constant dense<0.000000e+00> : vector<8xf32>
    %10 = vector.multi_reduction <add>, %9, %cst_5 [1] : vector<8x512xf32> to vector<8xf32>
    %11 = vector.shape_cast %10 : vector<8xf32> to vector<8x1xf32>
    %cst_6 = arith.constant 5.120000e+02 : f32
    %12 = vector.broadcast %cst_6 : f32 to vector<8x1xf32>
    %13 = arith.divf %11, %12 : vector<8x1xf32>
    %c0_7 = arith.constant 0 : index
    %c0_8 = arith.constant 0 : index
    %14 = vector.load %arg3[%c0_7, %c0_8] : memref<8x1xf32, #tpu.memory_space<vmem>>, vector<8x1xf32>
    %cst_9 = arith.constant 9.99999974E-6 : f32
    %15 = vector.broadcast %cst_9 : f32 to vector<8x1xf32>
    %16 = arith.addf %13, %15 : vector<8x1xf32>
    %17 = math.rsqrt %16 : vector<8x1xf32>
    %18 = arith.mulf %14, %17 : vector<8x1xf32>
    %19 = vector.broadcast %18 : vector<8x1xf32> to vector<8x512xf32>
    %20 = arith.mulf %8, %19 : vector<8x512xf32>
    %c0_10 = arith.constant 0 : index
    %c0_11 = arith.constant 0 : index
    %21 = vector.load %arg4[%c0_10, %c0_11] : memref<8x1xf32, #tpu.memory_space<vmem>>, vector<8x1xf32>
    %22 = vector.broadcast %21 : vector<8x1xf32> to vector<8x512xf32>
    %23 = arith.addf %20, %22 : vector<8x512xf32>
    %cst_12 = arith.constant 0.000000e+00 : f32
    %24 = vector.broadcast %cst_12 : f32 to vector<8x512xf32>
    %25 = arith.maximumf %23, %24 : vector<8x512xf32>
    %26 = vector.extract_strided_slice %25 {offsets = [0, 0], sizes = [8, 128], strides = [1, 1]} : vector<8x512xf32> to vector<8x128xf32>
    %27 = vector.extract_strided_slice %25 {offsets = [0, 128], sizes = [8, 128], strides = [1, 1]} : vector<8x512xf32> to vector<8x128xf32>
    %28 = arith.maximumf %26, %27 : vector<8x128xf32>
    %29 = vector.extract_strided_slice %25 {offsets = [0, 256], sizes = [8, 128], strides = [1, 1]} : vector<8x512xf32> to vector<8x128xf32>
    %30 = vector.extract_strided_slice %25 {offsets = [0, 384], sizes = [8, 128], strides = [1, 1]} : vector<8x512xf32> to vector<8x128xf32>
    %31 = arith.maximumf %29, %30 : vector<8x128xf32>
    %32 = arith.maximumf %28, %31 : vector<8x128xf32>
    %33 = arith.truncf %32 : vector<8x128xf32> to vector<8x128xbf16>
    %c0_13 = arith.constant 0 : index
    %c0_14 = arith.constant 0 : index
    %34 = vector.load %arg5[%c0_13, %c0_14] : memref<8x128xbf16, #tpu.memory_space<vmem>>, vector<8x128xbf16>
    tpu.vector_store %arg5[%c0_13, %c0_14], %33 {strides = array<i32>} : memref<8x128xbf16, #tpu.memory_space<vmem>>, vector<8x128xbf16>,
    return
  }
  func.func @transform_0(%arg0: i32) -> (i32, i32) {
    %c0_i32 = arith.constant 0 : i32
    %c0_i32_0 = arith.constant 0 : i32
    %c0_i32_1 = arith.constant 0 : i32
    return %c0_i32, %c0_i32_0 : i32, i32
  }
  func.func @transform_1(%arg0: i32) -> (i32, i32) {
    %c0_i32 = arith.constant 0 : i32
    %c0_i32_0 = arith.constant 0 : i32
    %c0_i32_1 = arith.constant 0 : i32
    return %c0_i32, %c0_i32_0 : i32, i32
  }
  func.func @transform_2(%arg0: i32) -> (i32, i32) {
    %c0_i32 = arith.constant 0 : i32
    %c0_i32_0 = arith.constant 0 : i32
    %c0_i32_1 = arith.constant 0 : i32
    return %c0_i32, %c0_i32_0 : i32, i32
  }
  func.func @transform_3(%arg0: i32) -> (i32, i32) {
    %c0_i32 = arith.constant 0 : i32
    %c0_i32_0 = arith.constant 0 : i32
    %c0_i32_1 = arith.constant 0 : i32
    return %c0_i32, %c0_i32_0 : i32, i32
  }
  func.func @transform_4(%arg0: i32) -> (i32, i32) {
    %c0_i32 = arith.constant 0 : i32
    %c0_i32_0 = arith.constant 0 : i32
    %c0_i32_1 = arith.constant 0 : i32
    return %c0_i32, %c0_i32_0 : i32, i32
  }
}

module attributes {stable_mosaic.version = 11 : i64} {
  func.func @_conv_bn_relu_kernel(%arg0: i32, %arg1: memref<80x128xbf16, #tpu.memory_space<vmem>>, %arg2: memref<16x80xbf16, #tpu.memory_space<vmem>>, %arg3: memref<16x1xf32, #tpu.memory_space<vmem>>, %arg4: memref<16x1xf32, #tpu.memory_space<vmem>>, %arg5: memref<16x128xbf16, #tpu.memory_space<vmem>>) attributes {dimension_semantics = [#tpu.dimension_semantics<arbitrary>], iteration_bounds = array<i64: 1>, scalar_prefetch = 0 : i64, scratch_operands = 0 : i64, tpu.core_type = #tpu.core_type<tc>, window_params = [{pipeline_mode = #tpu.pipeline_mode<synchronous>, transform_indices = @transform_0, window_bounds = array<i64: 80, 128>}, {pipeline_mode = #tpu.pipeline_mode<synchronous>, transform_indices = @transform_1, window_bounds = array<i64: 16, 80>}, {pipeline_mode = #tpu.pipeline_mode<synchronous>, transform_indices = @transform_2, window_bounds = array<i64: 16, 1>}, {pipeline_mode = #tpu.pipeline_mode<synchronous>, transform_indices = @transform_3, window_bounds = array<i64: 16, 1>}, {pipeline_mode = #tpu.pipeline_mode<synchronous>, transform_indices = @transform_4, window_bounds = array<i64: 16, 128>}]} {
    %c0 = arith.constant 0 : index
    %c0_0 = arith.constant 0 : index
    %0 = vector.load %arg2[%c0, %c0_0] : memref<16x80xbf16, #tpu.memory_space<vmem>>, vector<16x80xbf16>
    %c0_1 = arith.constant 0 : index
    %c0_2 = arith.constant 0 : index
    %1 = vector.load %arg1[%c0_1, %c0_2] : memref<80x128xbf16, #tpu.memory_space<vmem>>, vector<80x128xbf16>
    %cst = arith.constant dense<0.000000e+00> : vector<16x128xf32>
    %2 = tpu.matmul %0, %1, %cst {dimension_numbers = #tpu.dot_dimension_numbers<[1], [0], [0], [1], [0, 0, 1, 1], [], []>} : vector<16x80xbf16>, vector<80x128xbf16>, vector<16x128xf32> -> vector<16x128xf32>
    %cst_3 = arith.constant dense<0.000000e+00> : vector<16xf32>
    %3 = vector.multi_reduction <add>, %2, %cst_3 [1] : vector<16x128xf32> to vector<16xf32>
    %4 = vector.shape_cast %3 : vector<16xf32> to vector<16x1xf32>
    %cst_4 = arith.constant 1.280000e+02 : f32
    %5 = vector.broadcast %cst_4 : f32 to vector<16x1xf32>
    %6 = arith.divf %4, %5 : vector<16x1xf32>
    %7 = vector.broadcast %6 : vector<16x1xf32> to vector<16x128xf32>
    %8 = arith.subf %2, %7 : vector<16x128xf32>
    %9 = arith.mulf %8, %8 : vector<16x128xf32>
    %cst_5 = arith.constant dense<0.000000e+00> : vector<16xf32>
    %10 = vector.multi_reduction <add>, %9, %cst_5 [1] : vector<16x128xf32> to vector<16xf32>
    %11 = vector.shape_cast %10 : vector<16xf32> to vector<16x1xf32>
    %cst_6 = arith.constant 1.280000e+02 : f32
    %12 = vector.broadcast %cst_6 : f32 to vector<16x1xf32>
    %13 = arith.divf %11, %12 : vector<16x1xf32>
    %c0_7 = arith.constant 0 : index
    %c0_8 = arith.constant 0 : index
    %14 = vector.load %arg3[%c0_7, %c0_8] : memref<16x1xf32, #tpu.memory_space<vmem>>, vector<16x1xf32>
    %cst_9 = arith.constant 9.99999974E-6 : f32
    %15 = vector.broadcast %cst_9 : f32 to vector<16x1xf32>
    %16 = arith.addf %13, %15 : vector<16x1xf32>
    %17 = math.rsqrt %16 : vector<16x1xf32>
    %18 = arith.mulf %14, %17 : vector<16x1xf32>
    %19 = vector.broadcast %18 : vector<16x1xf32> to vector<16x128xf32>
    %20 = arith.mulf %8, %19 : vector<16x128xf32>
    %c0_10 = arith.constant 0 : index
    %c0_11 = arith.constant 0 : index
    %21 = vector.load %arg4[%c0_10, %c0_11] : memref<16x1xf32, #tpu.memory_space<vmem>>, vector<16x1xf32>
    %22 = vector.broadcast %21 : vector<16x1xf32> to vector<16x128xf32>
    %23 = arith.addf %20, %22 : vector<16x128xf32>
    %cst_12 = arith.constant 0.000000e+00 : f32
    %24 = vector.broadcast %cst_12 : f32 to vector<16x128xf32>
    %25 = arith.maximumf %23, %24 : vector<16x128xf32>
    %26 = arith.truncf %25 : vector<16x128xf32> to vector<16x128xbf16>
    %c0_13 = arith.constant 0 : index
    %c0_14 = arith.constant 0 : index
    %27 = vector.load %arg5[%c0_13, %c0_14] : memref<16x128xbf16, #tpu.memory_space<vmem>>, vector<16x128xbf16>
    tpu.vector_store %arg5[%c0_13, %c0_14], %26 {strides = array<i32>} : memref<16x128xbf16, #tpu.memory_space<vmem>>, vector<16x128xbf16>,
    return
  }
  func.func @transform_0(%arg0: i32) -> (i32, i32) {
    %c0_i32 = arith.constant 0 : i32
    %c0_i32_0 = arith.constant 0 : i32
    %c0_i32_1 = arith.constant 0 : i32
    return %c0_i32, %c0_i32_0 : i32, i32
  }
  func.func @transform_1(%arg0: i32) -> (i32, i32) {
    %c0_i32 = arith.constant 0 : i32
    %c0_i32_0 = arith.constant 0 : i32
    %c0_i32_1 = arith.constant 0 : i32
    return %c0_i32, %c0_i32_0 : i32, i32
  }
  func.func @transform_2(%arg0: i32) -> (i32, i32) {
    %c0_i32 = arith.constant 0 : i32
    %c0_i32_0 = arith.constant 0 : i32
    %c0_i32_1 = arith.constant 0 : i32
    return %c0_i32, %c0_i32_0 : i32, i32
  }
  func.func @transform_3(%arg0: i32) -> (i32, i32) {
    %c0_i32 = arith.constant 0 : i32
    %c0_i32_0 = arith.constant 0 : i32
    %c0_i32_1 = arith.constant 0 : i32
    return %c0_i32, %c0_i32_0 : i32, i32
  }
  func.func @transform_4(%arg0: i32) -> (i32, i32) {
    %c0_i32 = arith.constant 0 : i32
    %c0_i32_0 = arith.constant 0 : i32
    %c0_i32_1 = arith.constant 0 : i32
    return %c0_i32, %c0_i32_0 : i32, i32
  }
}

module attributes {stable_mosaic.version = 11 : i64} {
  func.func @_vq_kernel(%arg0: i32, %arg1: memref<4x128xf32, #tpu.memory_space<vmem>>, %arg2: memref<16x4xf32, #tpu.memory_space<vmem>>, %arg3: memref<4x128xbf16, #tpu.memory_space<vmem>>, %arg4: memref<1x1xf32, #tpu.memory_space<smem>>) attributes {dimension_semantics = [#tpu.dimension_semantics<arbitrary>], iteration_bounds = array<i64: 1>, scalar_prefetch = 0 : i64, scratch_operands = 0 : i64, tpu.core_type = #tpu.core_type<tc>, window_params = [{pipeline_mode = #tpu.pipeline_mode<synchronous>, transform_indices = @transform_0, window_bounds = array<i64: 4, 128>}, {pipeline_mode = #tpu.pipeline_mode<synchronous>, transform_indices = @transform_1, window_bounds = array<i64: 16, 4>}, {pipeline_mode = #tpu.pipeline_mode<synchronous>, transform_indices = @transform_2, window_bounds = array<i64: 4, 128>}, {transform_indices = @transform_3, window_bounds = array<i64: 1, 1>}]} {
    %c0 = arith.constant 0 : index
    %c0_0 = arith.constant 0 : index
    %0 = vector.load %arg1[%c0, %c0_0] : memref<4x128xf32, #tpu.memory_space<vmem>>, vector<4x128xf32>
    %c0_1 = arith.constant 0 : index
    %c0_2 = arith.constant 0 : index
    %1 = vector.load %arg2[%c0_1, %c0_2] : memref<16x4xf32, #tpu.memory_space<vmem>>, vector<16x4xf32>
    %cst = arith.constant dense<0.000000e+00> : vector<16x128xf32>
    %2 = tpu.matmul %1, %0, %cst {dimension_numbers = #tpu.dot_dimension_numbers<[1], [0], [0], [1], [0, 0, 1, 1], [], []>} : vector<16x4xf32>, vector<4x128xf32>, vector<16x128xf32> -> vector<16x128xf32>
    %3 = arith.mulf %0, %0 : vector<4x128xf32>
    %cst_3 = arith.constant dense<0.000000e+00> : vector<128xf32>
    %4 = vector.multi_reduction <add>, %3, %cst_3 [0] : vector<4x128xf32> to vector<128xf32>
    %5 = vector.shape_cast %4 : vector<128xf32> to vector<1x128xf32>
    %6 = arith.mulf %1, %1 : vector<16x4xf32>
    %cst_4 = arith.constant dense<0.000000e+00> : vector<16xf32>
    %7 = vector.multi_reduction <add>, %6, %cst_4 [1] : vector<16x4xf32> to vector<16xf32>
    %8 = vector.shape_cast %7 : vector<16xf32> to vector<16x1xf32>
    %9 = vector.broadcast %5 : vector<1x128xf32> to vector<16x128xf32>
    %10 = vector.broadcast %8 : vector<16x1xf32> to vector<16x128xf32>
    %11 = arith.addf %9, %10 : vector<16x128xf32>
    %cst_5 = arith.constant 2.000000e+00 : f32
    %12 = vector.broadcast %cst_5 : f32 to vector<16x128xf32>
    %13 = arith.mulf %12, %2 : vector<16x128xf32>
    %14 = arith.subf %11, %13 : vector<16x128xf32>
    %15 = tpu.iota {dimensions = array<i32: 0>} : vector<16x128xi32>
    %cst_6 = arith.constant dense<0x7F800000> : vector<128xf32>
    %16 = vector.multi_reduction <minimumf>, %14, %cst_6 [0] : vector<16x128xf32> to vector<128xf32>
    %17 = vector.shape_cast %16 : vector<128xf32> to vector<1x128xf32>
    %18 = vector.broadcast %17 : vector<1x128xf32> to vector<16x128xf32>
    %19 = arith.cmpf oeq, %14, %18 : vector<16x128xf32>
    %c16_i32 = arith.constant 16 : i32
    %20 = vector.broadcast %c16_i32 : i32 to vector<16x128xi32>
    %21 = arith.select %19, %15, %20 : vector<16x128xi1>, vector<16x128xi32>
    %cst_7 = arith.constant dense<2147483647> : vector<128xi32>
    %22 = vector.multi_reduction <minsi>, %21, %cst_7 [0] : vector<16x128xi32> to vector<128xi32>
    %23 = vector.shape_cast %22 : vector<128xi32> to vector<1x128xi32>
    %24 = vector.broadcast %23 : vector<1x128xi32> to vector<16x128xi32>
    %25 = arith.cmpi eq, %15, %24 : vector<16x128xi32>
    %26 = arith.extui %25 : vector<16x128xi1> to vector<16x128xi32>
    %27 = arith.sitofp %26 : vector<16x128xi32> to vector<16x128xf32>
    %cst_8 = arith.constant dense<0.000000e+00> : vector<4x128xf32>
    %28 = tpu.matmul %1, %27, %cst_8 {dimension_numbers = #tpu.dot_dimension_numbers<[0], [0], [1], [1], [0, 1, 1, 1], [], []>} : vector<16x4xf32>, vector<16x128xf32>, vector<4x128xf32> -> vector<4x128xf32>
    %29 = arith.truncf %28 : vector<4x128xf32> to vector<4x128xbf16>
    %c0_9 = arith.constant 0 : index
    %c0_10 = arith.constant 0 : index
    %30 = vector.load %arg3[%c0_9, %c0_10] : memref<4x128xbf16, #tpu.memory_space<vmem>>, vector<4x128xbf16>
    tpu.vector_store %arg3[%c0_9, %c0_10], %29 {strides = array<i32>} : memref<4x128xbf16, #tpu.memory_space<vmem>>, vector<4x128xbf16>,
    %31 = arith.subf %28, %0 : vector<4x128xf32>
    %32 = arith.mulf %31, %31 : vector<4x128xf32>
    %33 = vector.shape_cast %32 : vector<4x128xf32> to vector<1x4x128xf32>
    %cst_11 = arith.constant dense<0.000000e+00> : vector<1xf32>
    %34 = vector.multi_reduction <add>, %33, %cst_11 [1, 2] : vector<1x4x128xf32> to vector<1xf32>
    %35 = vector.shape_cast %34 : vector<1xf32> to vector<1x1x1xf32>
    %36 = vector.extract %35[0, 0, 0] : f32 from vector<1x1x1xf32>
    %c0_12 = arith.constant 0 : index
    %c0_13 = arith.constant 0 : index
    %37 = memref.load %arg4[%c0_12, %c0_13] : memref<1x1xf32, #tpu.memory_space<smem>>
    memref.store %36, %arg4[%c0_12, %c0_13] : memref<1x1xf32, #tpu.memory_space<smem>>
    return
  }
  func.func @transform_0(%arg0: i32) -> (i32, i32) {
    %c0_i32 = arith.constant 0 : i32
    %c0_i32_0 = arith.constant 0 : i32
    %c0_i32_1 = arith.constant 0 : i32
    return %c0_i32, %c0_i32_0 : i32, i32
  }
  func.func @transform_1(%arg0: i32) -> (i32, i32) {
    %c0_i32 = arith.constant 0 : i32
    %c0_i32_0 = arith.constant 0 : i32
    %c0_i32_1 = arith.constant 0 : i32
    return %c0_i32, %c0_i32_0 : i32, i32
  }
  func.func @transform_2(%arg0: i32) -> (i32, i32) {
    %c0_i32 = arith.constant 0 : i32
    %c0_i32_0 = arith.constant 0 : i32
    %c0_i32_1 = arith.constant 0 : i32
    return %c0_i32, %c0_i32_0 : i32, i32
  }
  func.func @transform_3(%arg0: i32) -> (i32, i32) {
    %c0_i32 = arith.constant 0 : i32
    %c0_i32_0 = arith.constant 0 : i32
    %c0_i32_1 = arith.constant 0 : i32
    return %c0_i32, %c0_i32_0 : i32, i32
  }
}

module attributes {stable_mosaic.version = 11 : i64} {
  func.func @_conv_bn_relu_kernel(%arg0: i32, %arg1: memref<160x128xbf16, #tpu.memory_space<vmem>>, %arg2: memref<4x160xbf16, #tpu.memory_space<vmem>>, %arg3: memref<4x1xf32, #tpu.memory_space<vmem>>, %arg4: memref<4x1xf32, #tpu.memory_space<vmem>>, %arg5: memref<4x128xf32, #tpu.memory_space<vmem>>) attributes {dimension_semantics = [#tpu.dimension_semantics<arbitrary>], iteration_bounds = array<i64: 1>, scalar_prefetch = 0 : i64, scratch_operands = 0 : i64, tpu.core_type = #tpu.core_type<tc>, window_params = [{pipeline_mode = #tpu.pipeline_mode<synchronous>, transform_indices = @transform_0, window_bounds = array<i64: 160, 128>}, {pipeline_mode = #tpu.pipeline_mode<synchronous>, transform_indices = @transform_1, window_bounds = array<i64: 4, 160>}, {pipeline_mode = #tpu.pipeline_mode<synchronous>, transform_indices = @transform_2, window_bounds = array<i64: 4, 1>}, {pipeline_mode = #tpu.pipeline_mode<synchronous>, transform_indices = @transform_3, window_bounds = array<i64: 4, 1>}, {pipeline_mode = #tpu.pipeline_mode<synchronous>, transform_indices = @transform_4, window_bounds = array<i64: 4, 128>}]} {
    %c0 = arith.constant 0 : index
    %c0_0 = arith.constant 0 : index
    %0 = vector.load %arg2[%c0, %c0_0] : memref<4x160xbf16, #tpu.memory_space<vmem>>, vector<4x160xbf16>
    %c0_1 = arith.constant 0 : index
    %c0_2 = arith.constant 0 : index
    %1 = vector.load %arg1[%c0_1, %c0_2] : memref<160x128xbf16, #tpu.memory_space<vmem>>, vector<160x128xbf16>
    %cst = arith.constant dense<0.000000e+00> : vector<4x128xf32>
    %2 = tpu.matmul %0, %1, %cst {dimension_numbers = #tpu.dot_dimension_numbers<[1], [0], [0], [1], [0, 0, 1, 1], [], []>} : vector<4x160xbf16>, vector<160x128xbf16>, vector<4x128xf32> -> vector<4x128xf32>
    %cst_3 = arith.constant dense<0.000000e+00> : vector<4xf32>
    %3 = vector.multi_reduction <add>, %2, %cst_3 [1] : vector<4x128xf32> to vector<4xf32>
    %4 = vector.shape_cast %3 : vector<4xf32> to vector<4x1xf32>
    %cst_4 = arith.constant 1.280000e+02 : f32
    %5 = vector.broadcast %cst_4 : f32 to vector<4x1xf32>
    %6 = arith.divf %4, %5 : vector<4x1xf32>
    %7 = vector.broadcast %6 : vector<4x1xf32> to vector<4x128xf32>
    %8 = arith.subf %2, %7 : vector<4x128xf32>
    %9 = arith.mulf %8, %8 : vector<4x128xf32>
    %cst_5 = arith.constant dense<0.000000e+00> : vector<4xf32>
    %10 = vector.multi_reduction <add>, %9, %cst_5 [1] : vector<4x128xf32> to vector<4xf32>
    %11 = vector.shape_cast %10 : vector<4xf32> to vector<4x1xf32>
    %cst_6 = arith.constant 1.280000e+02 : f32
    %12 = vector.broadcast %cst_6 : f32 to vector<4x1xf32>
    %13 = arith.divf %11, %12 : vector<4x1xf32>
    %c0_7 = arith.constant 0 : index
    %c0_8 = arith.constant 0 : index
    %14 = vector.load %arg3[%c0_7, %c0_8] : memref<4x1xf32, #tpu.memory_space<vmem>>, vector<4x1xf32>
    %cst_9 = arith.constant 9.99999974E-6 : f32
    %15 = vector.broadcast %cst_9 : f32 to vector<4x1xf32>
    %16 = arith.addf %13, %15 : vector<4x1xf32>
    %17 = math.rsqrt %16 : vector<4x1xf32>
    %18 = arith.mulf %14, %17 : vector<4x1xf32>
    %19 = vector.broadcast %18 : vector<4x1xf32> to vector<4x128xf32>
    %20 = arith.mulf %8, %19 : vector<4x128xf32>
    %c0_10 = arith.constant 0 : index
    %c0_11 = arith.constant 0 : index
    %21 = vector.load %arg4[%c0_10, %c0_11] : memref<4x1xf32, #tpu.memory_space<vmem>>, vector<4x1xf32>
    %22 = vector.broadcast %21 : vector<4x1xf32> to vector<4x128xf32>
    %23 = arith.addf %20, %22 : vector<4x128xf32>
    %cst_12 = arith.constant 0.000000e+00 : f32
    %24 = vector.broadcast %cst_12 : f32 to vector<4x128xf32>
    %25 = arith.maximumf %23, %24 : vector<4x128xf32>
    %c0_13 = arith.constant 0 : index
    %c0_14 = arith.constant 0 : index
    %26 = vector.load %arg5[%c0_13, %c0_14] : memref<4x128xf32, #tpu.memory_space<vmem>>, vector<4x128xf32>
    tpu.vector_store %arg5[%c0_13, %c0_14], %25 {strides = array<i32>} : memref<4x128xf32, #tpu.memory_space<vmem>>, vector<4x128xf32>,
    return
  }
  func.func @transform_0(%arg0: i32) -> (i32, i32) {
    %c0_i32 = arith.constant 0 : i32
    %c0_i32_0 = arith.constant 0 : i32
    %c0_i32_1 = arith.constant 0 : i32
    return %c0_i32, %c0_i32_0 : i32, i32
  }
  func.func @transform_1(%arg0: i32) -> (i32, i32) {
    %c0_i32 = arith.constant 0 : i32
    %c0_i32_0 = arith.constant 0 : i32
    %c0_i32_1 = arith.constant 0 : i32
    return %c0_i32, %c0_i32_0 : i32, i32
  }
  func.func @transform_2(%arg0: i32) -> (i32, i32) {
    %c0_i32 = arith.constant 0 : i32
    %c0_i32_0 = arith.constant 0 : i32
    %c0_i32_1 = arith.constant 0 : i32
    return %c0_i32, %c0_i32_0 : i32, i32
  }
  func.func @transform_3(%arg0: i32) -> (i32, i32) {
    %c0_i32 = arith.constant 0 : i32
    %c0_i32_0 = arith.constant 0 : i32
    %c0_i32_1 = arith.constant 0 : i32
    return %c0_i32, %c0_i32_0 : i32, i32
  }
  func.func @transform_4(%arg0: i32) -> (i32, i32) {
    %c0_i32 = arith.constant 0 : i32
    %c0_i32_0 = arith.constant 0 : i32
    %c0_i32_1 = arith.constant 0 : i32
    return %c0_i32, %c0_i32_0 : i32, i32
  }
}

module attributes {stable_mosaic.version = 11 : i64} {
  func.func @_conv_bn_relu_kernel(%arg0: i32, %arg1: memref<48x128xbf16, #tpu.memory_space<vmem>>, %arg2: memref<16x48xbf16, #tpu.memory_space<vmem>>, %arg3: memref<16x1xf32, #tpu.memory_space<vmem>>, %arg4: memref<16x1xf32, #tpu.memory_space<vmem>>, %arg5: memref<16x128xbf16, #tpu.memory_space<vmem>>) attributes {dimension_semantics = [#tpu.dimension_semantics<arbitrary>], iteration_bounds = array<i64: 1>, scalar_prefetch = 0 : i64, scratch_operands = 0 : i64, tpu.core_type = #tpu.core_type<tc>, window_params = [{pipeline_mode = #tpu.pipeline_mode<synchronous>, transform_indices = @transform_0, window_bounds = array<i64: 48, 128>}, {pipeline_mode = #tpu.pipeline_mode<synchronous>, transform_indices = @transform_1, window_bounds = array<i64: 16, 48>}, {pipeline_mode = #tpu.pipeline_mode<synchronous>, transform_indices = @transform_2, window_bounds = array<i64: 16, 1>}, {pipeline_mode = #tpu.pipeline_mode<synchronous>, transform_indices = @transform_3, window_bounds = array<i64: 16, 1>}, {pipeline_mode = #tpu.pipeline_mode<synchronous>, transform_indices = @transform_4, window_bounds = array<i64: 16, 128>}]} {
    %c0 = arith.constant 0 : index
    %c0_0 = arith.constant 0 : index
    %0 = vector.load %arg2[%c0, %c0_0] : memref<16x48xbf16, #tpu.memory_space<vmem>>, vector<16x48xbf16>
    %c0_1 = arith.constant 0 : index
    %c0_2 = arith.constant 0 : index
    %1 = vector.load %arg1[%c0_1, %c0_2] : memref<48x128xbf16, #tpu.memory_space<vmem>>, vector<48x128xbf16>
    %cst = arith.constant dense<0.000000e+00> : vector<16x128xf32>
    %2 = tpu.matmul %0, %1, %cst {dimension_numbers = #tpu.dot_dimension_numbers<[1], [0], [0], [1], [0, 0, 1, 1], [], []>} : vector<16x48xbf16>, vector<48x128xbf16>, vector<16x128xf32> -> vector<16x128xf32>
    %cst_3 = arith.constant dense<0.000000e+00> : vector<16xf32>
    %3 = vector.multi_reduction <add>, %2, %cst_3 [1] : vector<16x128xf32> to vector<16xf32>
    %4 = vector.shape_cast %3 : vector<16xf32> to vector<16x1xf32>
    %cst_4 = arith.constant 1.280000e+02 : f32
    %5 = vector.broadcast %cst_4 : f32 to vector<16x1xf32>
    %6 = arith.divf %4, %5 : vector<16x1xf32>
    %7 = vector.broadcast %6 : vector<16x1xf32> to vector<16x128xf32>
    %8 = arith.subf %2, %7 : vector<16x128xf32>
    %9 = arith.mulf %8, %8 : vector<16x128xf32>
    %cst_5 = arith.constant dense<0.000000e+00> : vector<16xf32>
    %10 = vector.multi_reduction <add>, %9, %cst_5 [1] : vector<16x128xf32> to vector<16xf32>
    %11 = vector.shape_cast %10 : vector<16xf32> to vector<16x1xf32>
    %cst_6 = arith.constant 1.280000e+02 : f32
    %12 = vector.broadcast %cst_6 : f32 to vector<16x1xf32>
    %13 = arith.divf %11, %12 : vector<16x1xf32>
    %c0_7 = arith.constant 0 : index
    %c0_8 = arith.constant 0 : index
    %14 = vector.load %arg3[%c0_7, %c0_8] : memref<16x1xf32, #tpu.memory_space<vmem>>, vector<16x1xf32>
    %cst_9 = arith.constant 9.99999974E-6 : f32
    %15 = vector.broadcast %cst_9 : f32 to vector<16x1xf32>
    %16 = arith.addf %13, %15 : vector<16x1xf32>
    %17 = math.rsqrt %16 : vector<16x1xf32>
    %18 = arith.mulf %14, %17 : vector<16x1xf32>
    %19 = vector.broadcast %18 : vector<16x1xf32> to vector<16x128xf32>
    %20 = arith.mulf %8, %19 : vector<16x128xf32>
    %c0_10 = arith.constant 0 : index
    %c0_11 = arith.constant 0 : index
    %21 = vector.load %arg4[%c0_10, %c0_11] : memref<16x1xf32, #tpu.memory_space<vmem>>, vector<16x1xf32>
    %22 = vector.broadcast %21 : vector<16x1xf32> to vector<16x128xf32>
    %23 = arith.addf %20, %22 : vector<16x128xf32>
    %cst_12 = arith.constant 0.000000e+00 : f32
    %24 = vector.broadcast %cst_12 : f32 to vector<16x128xf32>
    %25 = arith.maximumf %23, %24 : vector<16x128xf32>
    %26 = arith.truncf %25 : vector<16x128xf32> to vector<16x128xbf16>
    %c0_13 = arith.constant 0 : index
    %c0_14 = arith.constant 0 : index
    %27 = vector.load %arg5[%c0_13, %c0_14] : memref<16x128xbf16, #tpu.memory_space<vmem>>, vector<16x128xbf16>
    tpu.vector_store %arg5[%c0_13, %c0_14], %26 {strides = array<i32>} : memref<16x128xbf16, #tpu.memory_space<vmem>>, vector<16x128xbf16>,
    return
  }
  func.func @transform_0(%arg0: i32) -> (i32, i32) {
    %c0_i32 = arith.constant 0 : i32
    %c0_i32_0 = arith.constant 0 : i32
    %c0_i32_1 = arith.constant 0 : i32
    return %c0_i32, %c0_i32_0 : i32, i32
  }
  func.func @transform_1(%arg0: i32) -> (i32, i32) {
    %c0_i32 = arith.constant 0 : i32
    %c0_i32_0 = arith.constant 0 : i32
    %c0_i32_1 = arith.constant 0 : i32
    return %c0_i32, %c0_i32_0 : i32, i32
  }
  func.func @transform_2(%arg0: i32) -> (i32, i32) {
    %c0_i32 = arith.constant 0 : i32
    %c0_i32_0 = arith.constant 0 : i32
    %c0_i32_1 = arith.constant 0 : i32
    return %c0_i32, %c0_i32_0 : i32, i32
  }
  func.func @transform_3(%arg0: i32) -> (i32, i32) {
    %c0_i32 = arith.constant 0 : i32
    %c0_i32_0 = arith.constant 0 : i32
    %c0_i32_1 = arith.constant 0 : i32
    return %c0_i32, %c0_i32_0 : i32, i32
  }
  func.func @transform_4(%arg0: i32) -> (i32, i32) {
    %c0_i32 = arith.constant 0 : i32
    %c0_i32_0 = arith.constant 0 : i32
    %c0_i32_1 = arith.constant 0 : i32
    return %c0_i32, %c0_i32_0 : i32, i32
  }
}

module attributes {stable_mosaic.version = 11 : i64} {
  func.func @_conv_bn_relu_kernel(%arg0: i32, %arg1: memref<160x512xbf16, #tpu.memory_space<vmem>>, %arg2: memref<8x160xbf16, #tpu.memory_space<vmem>>, %arg3: memref<8x1xf32, #tpu.memory_space<vmem>>, %arg4: memref<8x1xf32, #tpu.memory_space<vmem>>, %arg5: memref<8x512xbf16, #tpu.memory_space<vmem>>) attributes {dimension_semantics = [#tpu.dimension_semantics<arbitrary>], iteration_bounds = array<i64: 1>, scalar_prefetch = 0 : i64, scratch_operands = 0 : i64, tpu.core_type = #tpu.core_type<tc>, window_params = [{pipeline_mode = #tpu.pipeline_mode<synchronous>, transform_indices = @transform_0, window_bounds = array<i64: 160, 512>}, {pipeline_mode = #tpu.pipeline_mode<synchronous>, transform_indices = @transform_1, window_bounds = array<i64: 8, 160>}, {pipeline_mode = #tpu.pipeline_mode<synchronous>, transform_indices = @transform_2, window_bounds = array<i64: 8, 1>}, {pipeline_mode = #tpu.pipeline_mode<synchronous>, transform_indices = @transform_3, window_bounds = array<i64: 8, 1>}, {pipeline_mode = #tpu.pipeline_mode<synchronous>, transform_indices = @transform_4, window_bounds = array<i64: 8, 512>}]} {
    %c0 = arith.constant 0 : index
    %c0_0 = arith.constant 0 : index
    %0 = vector.load %arg2[%c0, %c0_0] : memref<8x160xbf16, #tpu.memory_space<vmem>>, vector<8x160xbf16>
    %c0_1 = arith.constant 0 : index
    %c0_2 = arith.constant 0 : index
    %1 = vector.load %arg1[%c0_1, %c0_2] : memref<160x512xbf16, #tpu.memory_space<vmem>>, vector<160x512xbf16>
    %cst = arith.constant dense<0.000000e+00> : vector<8x512xf32>
    %2 = tpu.matmul %0, %1, %cst {dimension_numbers = #tpu.dot_dimension_numbers<[1], [0], [0], [1], [0, 0, 1, 1], [], []>} : vector<8x160xbf16>, vector<160x512xbf16>, vector<8x512xf32> -> vector<8x512xf32>
    %cst_3 = arith.constant dense<0.000000e+00> : vector<8xf32>
    %3 = vector.multi_reduction <add>, %2, %cst_3 [1] : vector<8x512xf32> to vector<8xf32>
    %4 = vector.shape_cast %3 : vector<8xf32> to vector<8x1xf32>
    %cst_4 = arith.constant 5.120000e+02 : f32
    %5 = vector.broadcast %cst_4 : f32 to vector<8x1xf32>
    %6 = arith.divf %4, %5 : vector<8x1xf32>
    %7 = vector.broadcast %6 : vector<8x1xf32> to vector<8x512xf32>
    %8 = arith.subf %2, %7 : vector<8x512xf32>
    %9 = arith.mulf %8, %8 : vector<8x512xf32>
    %cst_5 = arith.constant dense<0.000000e+00> : vector<8xf32>
    %10 = vector.multi_reduction <add>, %9, %cst_5 [1] : vector<8x512xf32> to vector<8xf32>
    %11 = vector.shape_cast %10 : vector<8xf32> to vector<8x1xf32>
    %cst_6 = arith.constant 5.120000e+02 : f32
    %12 = vector.broadcast %cst_6 : f32 to vector<8x1xf32>
    %13 = arith.divf %11, %12 : vector<8x1xf32>
    %c0_7 = arith.constant 0 : index
    %c0_8 = arith.constant 0 : index
    %14 = vector.load %arg3[%c0_7, %c0_8] : memref<8x1xf32, #tpu.memory_space<vmem>>, vector<8x1xf32>
    %cst_9 = arith.constant 9.99999974E-6 : f32
    %15 = vector.broadcast %cst_9 : f32 to vector<8x1xf32>
    %16 = arith.addf %13, %15 : vector<8x1xf32>
    %17 = math.rsqrt %16 : vector<8x1xf32>
    %18 = arith.mulf %14, %17 : vector<8x1xf32>
    %19 = vector.broadcast %18 : vector<8x1xf32> to vector<8x512xf32>
    %20 = arith.mulf %8, %19 : vector<8x512xf32>
    %c0_10 = arith.constant 0 : index
    %c0_11 = arith.constant 0 : index
    %21 = vector.load %arg4[%c0_10, %c0_11] : memref<8x1xf32, #tpu.memory_space<vmem>>, vector<8x1xf32>
    %22 = vector.broadcast %21 : vector<8x1xf32> to vector<8x512xf32>
    %23 = arith.addf %20, %22 : vector<8x512xf32>
    %cst_12 = arith.constant 0.000000e+00 : f32
    %24 = vector.broadcast %cst_12 : f32 to vector<8x512xf32>
    %25 = arith.maximumf %23, %24 : vector<8x512xf32>
    %26 = arith.truncf %25 : vector<8x512xf32> to vector<8x512xbf16>
    %c0_13 = arith.constant 0 : index
    %c0_14 = arith.constant 0 : index
    %27 = vector.load %arg5[%c0_13, %c0_14] : memref<8x512xbf16, #tpu.memory_space<vmem>>, vector<8x512xbf16>
    tpu.vector_store %arg5[%c0_13, %c0_14], %26 {strides = array<i32>} : memref<8x512xbf16, #tpu.memory_space<vmem>>, vector<8x512xbf16>,
    return
  }
  func.func @transform_0(%arg0: i32) -> (i32, i32) {
    %c0_i32 = arith.constant 0 : i32
    %c0_i32_0 = arith.constant 0 : i32
    %c0_i32_1 = arith.constant 0 : i32
    return %c0_i32, %c0_i32_0 : i32, i32
  }
  func.func @transform_1(%arg0: i32) -> (i32, i32) {
    %c0_i32 = arith.constant 0 : i32
    %c0_i32_0 = arith.constant 0 : i32
    %c0_i32_1 = arith.constant 0 : i32
    return %c0_i32, %c0_i32_0 : i32, i32
  }
  func.func @transform_2(%arg0: i32) -> (i32, i32) {
    %c0_i32 = arith.constant 0 : i32
    %c0_i32_0 = arith.constant 0 : i32
    %c0_i32_1 = arith.constant 0 : i32
    return %c0_i32, %c0_i32_0 : i32, i32
  }
  func.func @transform_3(%arg0: i32) -> (i32, i32) {
    %c0_i32 = arith.constant 0 : i32
    %c0_i32_0 = arith.constant 0 : i32
    %c0_i32_1 = arith.constant 0 : i32
    return %c0_i32, %c0_i32_0 : i32, i32
  }
  func.func @transform_4(%arg0: i32) -> (i32, i32) {
    %c0_i32 = arith.constant 0 : i32
    %c0_i32_0 = arith.constant 0 : i32
    %c0_i32_1 = arith.constant 0 : i32
    return %c0_i32, %c0_i32_0 : i32, i32
  }
}

module attributes {stable_mosaic.version = 11 : i64} {
  func.func @_conv_sigmoid_kernel(%arg0: i32, %arg1: memref<80x512xbf16, #tpu.memory_space<vmem>>, %arg2: memref<3x80xbf16, #tpu.memory_space<vmem>>, %arg3: memref<3x512xf32, #tpu.memory_space<vmem>>) attributes {dimension_semantics = [#tpu.dimension_semantics<arbitrary>], iteration_bounds = array<i64: 1>, scalar_prefetch = 0 : i64, scratch_operands = 0 : i64, tpu.core_type = #tpu.core_type<tc>, window_params = [{pipeline_mode = #tpu.pipeline_mode<synchronous>, transform_indices = @transform_0, window_bounds = array<i64: 80, 512>}, {pipeline_mode = #tpu.pipeline_mode<synchronous>, transform_indices = @transform_1, window_bounds = array<i64: 3, 80>}, {pipeline_mode = #tpu.pipeline_mode<synchronous>, transform_indices = @transform_2, window_bounds = array<i64: 3, 512>}]} {
    %c0 = arith.constant 0 : index
    %c0_0 = arith.constant 0 : index
    %0 = vector.load %arg2[%c0, %c0_0] : memref<3x80xbf16, #tpu.memory_space<vmem>>, vector<3x80xbf16>
    %c0_1 = arith.constant 0 : index
    %c0_2 = arith.constant 0 : index
    %1 = vector.load %arg1[%c0_1, %c0_2] : memref<80x512xbf16, #tpu.memory_space<vmem>>, vector<80x512xbf16>
    %cst = arith.constant dense<0.000000e+00> : vector<3x512xf32>
    %2 = tpu.matmul %0, %1, %cst {dimension_numbers = #tpu.dot_dimension_numbers<[1], [0], [0], [1], [0, 0, 1, 1], [], []>} : vector<3x80xbf16>, vector<80x512xbf16>, vector<3x512xf32> -> vector<3x512xf32>
    %3 = arith.negf %2 : vector<3x512xf32>
    %4 = math.exp %3 : vector<3x512xf32>
    %cst_3 = arith.constant 1.000000e+00 : f32
    %5 = vector.broadcast %cst_3 : f32 to vector<3x512xf32>
    %6 = arith.addf %5, %4 : vector<3x512xf32>
    %7 = arith.divf %5, %6 : vector<3x512xf32>
    %c0_4 = arith.constant 0 : index
    %c0_5 = arith.constant 0 : index
    %8 = vector.load %arg3[%c0_4, %c0_5] : memref<3x512xf32, #tpu.memory_space<vmem>>, vector<3x512xf32>
    tpu.vector_store %arg3[%c0_4, %c0_5], %7 {strides = array<i32>} : memref<3x512xf32, #tpu.memory_space<vmem>>, vector<3x512xf32>,
    return
  }
  func.func @transform_0(%arg0: i32) -> (i32, i32) {
    %c0_i32 = arith.constant 0 : i32
    %c0_i32_0 = arith.constant 0 : i32
    %c0_i32_1 = arith.constant 0 : i32
    return %c0_i32, %c0_i32_0 : i32, i32
  }
  func.func @transform_1(%arg0: i32) -> (i32, i32) {
    %c0_i32 = arith.constant 0 : i32
    %c0_i32_0 = arith.constant 0 : i32
    %c0_i32_1 = arith.constant 0 : i32
    return %c0_i32, %c0_i32_0 : i32, i32
  }
  func.func @transform_2(%arg0: i32) -> (i32, i32) {
    %c0_i32 = arith.constant 0 : i32
    %c0_i32_0 = arith.constant 0 : i32
    %c0_i32_1 = arith.constant 0 : i32
    return %c0_i32, %c0_i32_0 : i32, i32
  }
}

</mosaic_0001>

<llo_original>
// kernel: vqvae_forward.7
$region0: #{vqvae_forward.7}
  #allocation0 [shape = 'u32[]', space=smem, size = 0x4, offset = 0x4, fixed_abs, tag = 'smem constant byte address 0x4 - core index']
  #allocation1 [shape = 'u32[144,128]{1,0:T(1,128)}', space=vmem, size = 0x12000, scoped, tag = 'internal scratch']
  %s0 = inlined_call_operand.vmem [shape: bf16[32,512], index: 0, kind: input, shape index: {}]
  %s1 = inlined_call_operand.vmem [shape: bf16[8,32], index: 1, kind: input, shape index: {}]
  %s2 = inlined_call_operand.vmem [shape: f32[8,1], index: 2, kind: input, shape index: {}]
  %s3 = inlined_call_operand.vmem [shape: f32[8,1], index: 3, kind: input, shape index: {}]
  %s4 = inlined_call_operand.vmem [shape: bf16[8,128], index: 4, kind: output, shape index: {}]
  %s5 = sld [smem:[#allocation0]]
  $region26: #{vqvae_forward.7} parent=0
    _
  %s7 = ssub.s32 1, %s5
  %s8 = scalar_select 0, %s7, %s5
  // Predicated region
  $region2: #{vqvae_forward.7} parent=0 // pred_check
    _
  $region3: #{vqvae_forward.7} parent=0 // pred_check_branch
    %10 = sbr.rel (0) target = $region5
  $region4: #{vqvae_forward.7} parent=0 // pred_region
    _
  $region5: #{vqvae_forward.7} parent=0 // pred_fallthru
    _
  // Predicated region
  $region6: #{vqvae_forward.7} parent=0 // pred_check
    _
  $region7: #{vqvae_forward.7} parent=0 // pred_check_branch
    %12 = sbr.rel (0) target = $region9
  $region8: #{vqvae_forward.7} parent=0 // pred_region
    _
  $region9: #{vqvae_forward.7} parent=0 // pred_fallthru
    _
  // Predicated region
  $region10: #{vqvae_forward.7} parent=0 // pred_check
    _
  $region11: #{vqvae_forward.7} parent=0 // pred_check_branch
    %14 = sbr.rel (0) target = $region13
  $region12: #{vqvae_forward.7} parent=0 // pred_region
    _
  $region13: #{vqvae_forward.7} parent=0 // pred_fallthru
    _
  // Predicated region
  $region14: #{vqvae_forward.7} parent=0 // pred_check
    _
  $region15: #{vqvae_forward.7} parent=0 // pred_check_branch
    %16 = sbr.rel (0) target = $region17
  $region16: #{vqvae_forward.7} parent=0 // pred_region
    _
  $region17: #{vqvae_forward.7} parent=0 // pred_fallthru
    _
  %v18 = vld [vmem:[%s1] sm:$0xf]
  %v19 = vld [vmem:[%s0] sm:$0xff]
  %v20 = vld [vmem:[%s0 + $0x8] sm:$0xff]
  %v21 = vld [vmem:[%s0 + $0x10] sm:$0xff]
  %v22 = vld [vmem:[%s0 + $0x18] sm:$0xff]
  %v23 = vld [vmem:[%s0 + $0x20] sm:$0xff]
  %v24 = vld [vmem:[%s0 + $0x28] sm:$0xff]
  %v25 = vld [vmem:[%s0 + $0x30] sm:$0xff]
  %v26 = vld [vmem:[%s0 + $0x38] sm:$0xff]
  %v35 = vunpack.c.l.b16 %v19
  %v36 = vunpack.c.h.b16 %v19
  %v37 = vunpack.c.l.b16 %v20
  %v38 = vunpack.c.h.b16 %v20
  %v39 = vunpack.c.l.b16 %v21
  %v40 = vunpack.c.h.b16 %v21
  %v41 = vunpack.c.l.b16 %v22
  %v42 = vunpack.c.h.b16 %v22
  %v43 = vunpack.c.l.b16 %v23
  %v44 = vunpack.c.h.b16 %v23
  %v45 = vunpack.c.l.b16 %v24
  %v46 = vunpack.c.h.b16 %v24
  %v47 = vunpack.c.l.b16 %v25
  %v48 = vunpack.c.h.b16 %v25
  %v49 = vunpack.c.l.b16 %v26
  %v50 = vunpack.c.h.b16 %v26
  %v51 = vpack.c.b16 %v39, %v35
  %v52 = vpack.c.b16 %v40, %v36
  %v53 = vpack.c.b16 %v41, %v37
  %v54 = vpack.c.b16 %v42, %v38
  %v55 = vpack.c.b16 %v47, %v43
  %v56 = vpack.c.b16 %v48, %v44
  %v57 = vpack.c.b16 %v49, %v45
  %v58 = vpack.c.b16 %v50, %v46
  %vm67 = vcmask 261120
  %v69 = vsel %vm67, %v18, 0
  %71 = vmatprep.subr.bf16.mxu0 0
  %72 = vmatpush1.bf16.msra.mxu0 0
  %73 = vmatprep.subr.bf16.mxu0 0
  %74 = vmatpush1.bf16.msra.mxu0 0
  %75 = vmatprep.subr.bf16.mxu0 0
  %76 = vmatpush1.bf16.msra.mxu0 0
  %77 = vmatprep.subr.bf16.mxu0 0
  %78 = vmatpush1.bf16.msra.mxu0 0
  %79 = vmatprep.subr.bf16.mxu0 0
  %80 = vmatpush1.bf16.msra.mxu0 0
  %81 = vmatprep.subr.bf16.mxu0 0
  %82 = vmatpush1.bf16.msra.mxu0 0
  %83 = vmatprep.subr.bf16.mxu0 %v56
  %84 = vmatpush1.bf16.msra.mxu0 %v55
  %85 = vmatprep.subr.bf16.mxu0 %v52
  %86 = vmatpush1.bf16.msra.mxu0 %v51
  %87 = vmatprep.subr.bf16.mxu0 0
  %88 = vmatpush2.bf16.msra.mxu0 0
  %89 = vmatprep.subr.bf16.mxu0 0
  %90 = vmatpush2.bf16.msra.mxu0 0
  %91 = vmatprep.subr.bf16.mxu0 0
  %92 = vmatpush2.bf16.msra.mxu0 0
  %93 = vmatprep.subr.bf16.mxu0 0
  %94 = vmatpush2.bf16.msra.mxu0 0
  %95 = vmatprep.subr.bf16.mxu0 0
  %96 = vmatpush2.bf16.msra.mxu0 0
  %97 = vmatprep.subr.bf16.mxu0 0
  %98 = vmatpush2.bf16.msra.mxu0 0
  %99 = vmatprep.subr.bf16.mxu0 0
  %100 = vmatpush2.bf16.msra.mxu0 0
  %101 = vmatprep.subr.bf16.mxu0 0
  %102 = vmatpush2.bf16.msra.mxu0 0
  %103 = vmatprep.mubr.bf16.mxu0 0
  %104 = vmatmul.mubr.bf16.gmra.mxu0 %v69
  %v105 = vpop.f32.mrf.mxu0
  %v106 = vadd.f32 0.0, %v105
  %v107 = vpop.f32.mrf.mxu0
  %v108 = vadd.f32 0.0, %v107
  %v109 = vpop.f32.mrf.mxu0
  %v110 = vpop.f32.mrf.mxu0
  %111 = vdwg.mxu0
  %112 = vmatprep.subr.bf16.mxu0 0
  %113 = vmatpush1.bf16.msra.mxu0 0
  %114 = vmatprep.subr.bf16.mxu0 0
  %115 = vmatpush1.bf16.msra.mxu0 0
  %116 = vmatprep.subr.bf16.mxu0 0
  %117 = vmatpush1.bf16.msra.mxu0 0
  %118 = vmatprep.subr.bf16.mxu0 0
  %119 = vmatpush1.bf16.msra.mxu0 0
  %120 = vmatprep.subr.bf16.mxu0 0
  %121 = vmatpush1.bf16.msra.mxu0 0
  %122 = vmatprep.subr.bf16.mxu0 0
  %123 = vmatpush1.bf16.msra.mxu0 0
  %124 = vmatprep.subr.bf16.mxu0 %v58
  %125 = vmatpush1.bf16.msra.mxu0 %v57
  %126 = vmatprep.subr.bf16.mxu0 %v54
  %127 = vmatpush1.bf16.msra.mxu0 %v53
  %128 = vmatprep.subr.bf16.mxu0 0
  %129 = vmatpush2.bf16.msra.mxu0 0
  %130 = vmatprep.subr.bf16.mxu0 0
  %131 = vmatpush2.bf16.msra.mxu0 0
  %132 = vmatprep.subr.bf16.mxu0 0
  %133 = vmatpush2.bf16.msra.mxu0 0
  %134 = vmatprep.subr.bf16.mxu0 0
  %135 = vmatpush2.bf16.msra.mxu0 0
  %136 = vmatprep.subr.bf16.mxu0 0
  %137 = vmatpush2.bf16.msra.mxu0 0
  %138 = vmatprep.subr.bf16.mxu0 0
  %139 = vmatpush2.bf16.msra.mxu0 0
  %140 = vmatprep.subr.bf16.mxu0 0
  %141 = vmatpush2.bf16.msra.mxu0 0
  %142 = vmatprep.subr.bf16.mxu0 0
  %143 = vmatpush2.bf16.msra.mxu0 0
  %144 = vmatprep.mubr.bf16.mxu0 0
  %145 = vmatmul.mubr.bf16.gmra.mxu0 %v69
  %v146 = vpop.f32.mrf.mxu0
  %v147 = vadd.f32 0.0, %v146
  %v148 = vpop.f32.mrf.mxu0
  %v149 = vadd.f32 0.0, %v148
  %v150 = vpop.f32.mrf.mxu0
  %v151 = vpop.f32.mrf.mxu0
  %152 = vdwg.mxu0
  %v153 = vadd.f32 %v106, %v108
  %v154 = vadd.f32 %v153, %v147
  %v155 = vadd.f32 %v154, %v149
  %156 = vadd.xlane.f32.xlu0 %v155
  %v157 = vpop.xlane.xlu0 %156
  %v158 = vrcp.pop 512.0
  %v159 = vmul.f32 %v157, %v158
  %v160 = vsub.f32 %v106, %v159
  %v161 = vsub.f32 %v108, %v159
  %v162 = vsub.f32 %v147, %v159
  %v163 = vsub.f32 %v149, %v159
  %v164 = vmul.f32 %v160, %v160
  %v165 = vmul.f32 %v161, %v161
  %v166 = vmul.f32 %v162, %v162
  %v167 = vmul.f32 %v163, %v163
  %v168 = vadd.f32 %v164, %v165
  %v169 = vadd.f32 %v168, %v166
  %v170 = vadd.f32 %v169, %v167
  %171 = vadd.xlane.f32.xlu0 %v170
  %v172 = vpop.xlane.xlu0 %171
  %v173 = vmul.f32 %v172, %v158
  %v174 = vld [vmem:[%s2] sm:$0xff]
  %v175 = vadd.f32 %v173, 1e-05
  %v176 = vrsqrt.pop %v175
  %v177 = vmul.f32 %v174, %v176
  %179 = vset.pattern.permute.xlu0 0
  %180 = vperm.xlu0 %179, %v177
  %v181 = vpop.permute.xlu0 %180
  %v183 = vmul.f32 %v160, %v181
  %v184 = vmul.f32 %v161, %v181
  %v185 = vmul.f32 %v162, %v181
  %v186 = vmul.f32 %v163, %v181
  %v187 = vld [vmem:[%s3] sm:$0xff]
  %189 = vset.pattern.permute.xlu0 0
  %190 = vperm.xlu0 %189, %v187
  %v191 = vpop.permute.xlu0 %190
  %v193 = vadd.f32 %v183, %v191
  %v194 = vadd.f32 %v184, %v191
  %v195 = vadd.f32 %v185, %v191
  %v196 = vadd.f32 %v186, %v191
  %v197 = vmax.f32 %v193, 0.0
  %v198 = vmax.f32 %v194, 0.0
  %v199 = vmax.f32 %v195, 0.0
  %v200 = vmax.f32 %v196, 0.0
  %v201 = vmax.f32 %v197, %v198
  %v202 = vmax.f32 %v199, %v200
  %v203 = vmax.f32 %v201, %v202
  %v204 = vpack.c.bf16 %v203, %v203
  %205 = vst [vmem:[%s4] sm:$0xf] %v204
  // Predicated region
  $region18: #{vqvae_forward.7} parent=0 // pred_check
    _
  $region19: #{vqvae_forward.7} parent=0 // pred_check_branch
    %207 = sbr.rel (0) target = $region21
  $region20: #{vqvae_forward.7} parent=0 // pred_region
    _
  $region21: #{vqvae_forward.7} parent=0 // pred_fallthru
    _
  // Predicated region
  $region22: #{vqvae_forward.7} parent=0 // pred_check
    _
  $region23: #{vqvae_forward.7} parent=0 // pred_check_branch
    %209 = sbr.rel (0) target = $region25
  $region24: #{vqvae_forward.7} parent=0 // pred_region
    _
  $region25: #{vqvae_forward.7} parent=0 // pred_fallthru
    _

// kernel: vqvae_forward.8
$region0: #{vqvae_forward.8}
  #allocation0 [shape = 'u32[]', space=smem, size = 0x4, offset = 0x4, fixed_abs, tag = 'smem constant byte address 0x4 - core index']
  #allocation1 [shape = 'u32[144,128]{1,0:T(1,128)}', space=vmem, size = 0x12000, scoped, tag = 'internal scratch']
  %s0 = inlined_call_operand.vmem [shape: bf16[80,128], index: 0, kind: input, shape index: {}]
  %s1 = inlined_call_operand.vmem [shape: bf16[16,80], index: 1, kind: input, shape index: {}]
  %s2 = inlined_call_operand.vmem [shape: f32[16,1], index: 2, kind: input, shape index: {}]
  %s3 = inlined_call_operand.vmem [shape: f32[16,1], index: 3, kind: input, shape index: {}]
  %s4 = inlined_call_operand.vmem [shape: bf16[16,128], index: 4, kind: output, shape index: {}]
  %s5 = sld [smem:[#allocation0]]
  $region26: #{vqvae_forward.8} parent=0
    _
  %s7 = ssub.s32 1, %s5
  %s8 = scalar_select 0, %s7, %s5
  // Predicated region
  $region2: #{vqvae_forward.8} parent=0 // pred_check
    _
  $region3: #{vqvae_forward.8} parent=0 // pred_check_branch
    %10 = sbr.rel (0) target = $region5
  $region4: #{vqvae_forward.8} parent=0 // pred_region
    _
  $region5: #{vqvae_forward.8} parent=0 // pred_fallthru
    _
  // Predicated region
  $region6: #{vqvae_forward.8} parent=0 // pred_check
    _
  $region7: #{vqvae_forward.8} parent=0 // pred_check_branch
    %12 = sbr.rel (0) target = $region9
  $region8: #{vqvae_forward.8} parent=0 // pred_region
    _
  $region9: #{vqvae_forward.8} parent=0 // pred_fallthru
    _
  // Predicated region
  $region10: #{vqvae_forward.8} parent=0 // pred_check
    _
  $region11: #{vqvae_forward.8} parent=0 // pred_check_branch
    %14 = sbr.rel (0) target = $region13
  $region12: #{vqvae_forward.8} parent=0 // pred_region
    _
  $region13: #{vqvae_forward.8} parent=0 // pred_fallthru
    _
  // Predicated region
  $region14: #{vqvae_forward.8} parent=0 // pred_check
    _
  $region15: #{vqvae_forward.8} parent=0 // pred_check_branch
    %16 = sbr.rel (0) target = $region17
  $region16: #{vqvae_forward.8} parent=0 // pred_region
    _
  $region17: #{vqvae_forward.8} parent=0 // pred_fallthru
    _
  %v18 = vld [vmem:[%s1] sm:$0xf]
  %v19 = vld [vmem:[%s1 + $0x4] sm:$0xf]
  %v20 = vld [vmem:[%s0] sm:$0xf]
  %v21 = vld [vmem:[%s0 + $0x4] sm:$0xf]
  %v22 = vld [vmem:[%s0 + $0x8] sm:$0xf]
  %v23 = vld [vmem:[%s0 + $0xc] sm:$0xf]
  %v24 = vld [vmem:[%s0 + $0x10] sm:$0xf]
  %v25 = vld [vmem:[%s0 + $0x14] sm:$0xf]
  %v26 = vld [vmem:[%s0 + $0x18] sm:$0xf]
  %v27 = vld [vmem:[%s0 + $0x1c] sm:$0xf]
  %v28 = vld [vmem:[%s0 + $0x20] sm:$0xf]
  %v29 = vld [vmem:[%s0 + $0x24] sm:$0xf]
  %v32 = vunpack.c.l.b16 %v18
  %v33 = vunpack.c.l.b16 %v19
  %v34 = vpack.c.b16 %v33, %v32
  %v45 = vunpack.c.l.b16 %v20
  %v46 = vunpack.c.l.b16 %v21
  %v47 = vunpack.c.l.b16 %v22
  %v48 = vunpack.c.l.b16 %v23
  %v49 = vunpack.c.l.b16 %v24
  %v50 = vunpack.c.l.b16 %v25
  %v51 = vunpack.c.l.b16 %v26
  %v52 = vunpack.c.l.b16 %v27
  %v53 = vunpack.c.l.b16 %v28
  %v54 = vunpack.c.l.b16 %v29
  %v55 = vpack.c.b16 %v46, %v45
  %v56 = vpack.c.b16 %v48, %v47
  %v57 = vpack.c.b16 %v50, %v49
  %v58 = vpack.c.b16 %v52, %v51
  %v59 = vpack.c.b16 %v54, %v53
  %vm65 = vcmask 654336
  %v67 = vsel %vm65, %v34, 0
  %69 = vmatprep.subr.bf16.mxu0 0
  %70 = vmatpush1.bf16.msra.mxu0 0
  %71 = vmatprep.subr.bf16.mxu0 0
  %72 = vmatpush1.bf16.msra.mxu0 0
  %73 = vmatprep.subr.bf16.mxu0 0
  %74 = vmatpush1.bf16.msra.mxu0 0
  %75 = vmatprep.subr.bf16.mxu0 0
  %76 = vmatpush1.bf16.msra.mxu0 %v59
  %77 = vmatprep.subr.bf16.mxu0 0
  %78 = vmatpush1.bf16.msra.mxu0 %v58
  %79 = vmatprep.subr.bf16.mxu0 0
  %80 = vmatpush1.bf16.msra.mxu0 %v57
  %81 = vmatprep.subr.bf16.mxu0 0
  %82 = vmatpush1.bf16.msra.mxu0 %v56
  %83 = vmatprep.subr.bf16.mxu0 0
  %84 = vmatpush1.bf16.msra.mxu0 %v55
  %85 = vmatprep.subr.bf16.mxu0 0
  %86 = vmatpush2.bf16.msra.mxu0 0
  %87 = vmatprep.subr.bf16.mxu0 0
  %88 = vmatpush2.bf16.msra.mxu0 0
  %89 = vmatprep.subr.bf16.mxu0 0
  %90 = vmatpush2.bf16.msra.mxu0 0
  %91 = vmatprep.subr.bf16.mxu0 0
  %92 = vmatpush2.bf16.msra.mxu0 0
  %93 = vmatprep.subr.bf16.mxu0 0
  %94 = vmatpush2.bf16.msra.mxu0 0
  %95 = vmatprep.subr.bf16.mxu0 0
  %96 = vmatpush2.bf16.msra.mxu0 0
  %97 = vmatprep.subr.bf16.mxu0 0
  %98 = vmatpush2.bf16.msra.mxu0 0
  %99 = vmatprep.subr.bf16.mxu0 0
  %100 = vmatpush2.bf16.msra.mxu0 0
  %101 = vmatprep.mubr.bf16.mxu0 0
  %102 = vmatmul.mubr.bf16.gmra.mxu0 %v67
  %v103 = vpop.f32.mrf.mxu0
  %v104 = vadd.f32 0.0, %v103
  %v105 = vpop.f32.mrf.mxu0
  %v106 = vpop.f32.mrf.mxu0
  %v107 = vadd.f32 0.0, %v106
  %v108 = vpop.f32.mrf.mxu0
  %109 = vdwg.mxu0
  %110 = vadd.xlane.f32.xlu0 %v104
  %v111 = vpop.xlane.xlu0 %110
  %112 = vadd.xlane.f32.xlu0 %v107
  %v113 = vpop.xlane.xlu0 %112
  %v114 = vrcp.pop 128.0
  %v115 = vmul.f32 %v111, %v114
  %v116 = vmul.f32 %v113, %v114
  %v117 = vsub.f32 %v104, %v115
  %v118 = vsub.f32 %v107, %v116
  %v119 = vmul.f32 %v117, %v117
  %v120 = vmul.f32 %v118, %v118
  %121 = vadd.xlane.f32.xlu0 %v119
  %v122 = vpop.xlane.xlu0 %121
  %123 = vadd.xlane.f32.xlu0 %v120
  %v124 = vpop.xlane.xlu0 %123
  %v125 = vmul.f32 %v122, %v114
  %v126 = vmul.f32 %v124, %v114
  %v127 = vld [vmem:[%s2] sm:$0xff]
  %v128 = vld [vmem:[%s2 + $0x8] sm:$0xff]
  %v129 = vadd.f32 %v125, 1e-05
  %v130 = vadd.f32 %v126, 1e-05
  %v131 = vrsqrt.pop %v129
  %v132 = vrsqrt.pop %v130
  %v133 = vmul.f32 %v127, %v131
  %v134 = vmul.f32 %v128, %v132
  %136 = vset.pattern.permute.xlu0 0
  %137 = vperm.xlu0 %136, %v133
  %v138 = vpop.permute.xlu0 %137
  %141 = vset.pattern.permute.xlu0 0
  %142 = vperm.xlu0 %141, %v134
  %v143 = vpop.permute.xlu0 %142
  %v145 = vmul.f32 %v117, %v138
  %v146 = vmul.f32 %v118, %v143
  %v147 = vld [vmem:[%s3] sm:$0xff]
  %v148 = vld [vmem:[%s3 + $0x8] sm:$0xff]
  %150 = vset.pattern.permute.xlu0 0
  %151 = vperm.xlu0 %150, %v147
  %v152 = vpop.permute.xlu0 %151
  %155 = vset.pattern.permute.xlu0 0
  %156 = vperm.xlu0 %155, %v148
  %v157 = vpop.permute.xlu0 %156
  %v159 = vadd.f32 %v145, %v152
  %v160 = vadd.f32 %v146, %v157
  %v161 = vmax.f32 %v159, 0.0
  %v162 = vmax.f32 %v160, 0.0
  %v163 = vpack.c.bf16 %v162, %v161
  %v165 = vunpack.c.l.b16 %v163
  %v166 = vunpack.c.h.b16 %v163
  %v167 = vpack.c.b16 %v165, %v165
  %v168 = vpack.c.b16 %v166, %v166
  %171 = vst [vmem:[%s4] sm:$0xf] %v167
  %172 = vst [vmem:[%s4 + $0x4] sm:$0xf] %v168
  // Predicated region
  $region18: #{vqvae_forward.8} parent=0 // pred_check
    _
  $region19: #{vqvae_forward.8} parent=0 // pred_check_branch
    %174 = sbr.rel (0) target = $region21
  $region20: #{vqvae_forward.8} parent=0 // pred_region
    _
  $region21: #{vqvae_forward.8} parent=0 // pred_fallthru
    _
  // Predicated region
  $region22: #{vqvae_forward.8} parent=0 // pred_check
    _
  $region23: #{vqvae_forward.8} parent=0 // pred_check_branch
    %176 = sbr.rel (0) target = $region25
  $region24: #{vqvae_forward.8} parent=0 // pred_region
    _
  $region25: #{vqvae_forward.8} parent=0 // pred_fallthru
    _

// kernel: vqvae_forward.10
$region0: #{vqvae_forward.10}
  #allocation0 [shape = 'u32[]', space=smem, size = 0x4, offset = 0x4, fixed_abs, tag = 'smem constant byte address 0x4 - core index']
  #allocation1 [shape = 'u32[144,128]{1,0:T(1,128)}', space=vmem, size = 0x12000, scoped, tag = 'internal scratch']
  %s0 = inlined_call_operand.vmem [shape: f32[4,128], index: 0, kind: input, shape index: {}]
  %s1 = inlined_call_operand.vmem [shape: f32[16,4], index: 1, kind: input, shape index: {}]
  %s2 = inlined_call_operand.vmem [shape: bf16[4,128], index: 2, kind: output, shape index: {0}]
  %s3 = inlined_call_operand.hbm [shape: f32[1,1], index: 3, kind: output, shape index: {1}]
  %4 = xla_tuple %s2, %s3
  %s5 = sld [smem:[#allocation0]]
  $region26: #{vqvae_forward.10} parent=0
    _
  %s7 = ssub.s32 1, %s5
  %s8 = scalar_select 0, %s7, %s5
  $region1: #{vqvae_forward.10} parent=0
    #allocation2 [shape = 'u8[512]{0}', space=smem, size = 0x200, scoped, tag = 'output window, operand 1, single buffered']
    #allocation3 [shape = 's32[1]{0}', space=sflag, size = 0x4, scoped, tag = 'scoped memory for vqvae_forward.10']
    %9 = vsyncpa [#allocation3], 0
    // Predicated region
    $region2: #{vqvae_forward.10} parent=1 // pred_check
      _
    $region3: #{vqvae_forward.10} parent=1 // pred_check_branch
      %11 = sbr.rel (0) target = $region5
    $region4: #{vqvae_forward.10} parent=1 // pred_region
      _
    $region5: #{vqvae_forward.10} parent=1 // pred_fallthru
      _
    // Predicated region
    $region6: #{vqvae_forward.10} parent=1 // pred_check
      _
    $region7: #{vqvae_forward.10} parent=1 // pred_check_branch
      %13 = sbr.rel (0) target = $region9
    $region8: #{vqvae_forward.10} parent=1 // pred_region
      _
    $region9: #{vqvae_forward.10} parent=1 // pred_fallthru
      _
    %v14 = vld [vmem:[%s0] sm:$0xf]
    %v15 = vld [vmem:[%s1] sm:$0xff]
    %v16 = vld [vmem:[%s1 + $0x8] sm:$0xff]
    %vm17 = vcmask 31744
    %v19 = vsel %vm17, %v15, 0
    %v22 = vsel %vm17, %v16, 0
    %vm24 = vcmask 1043456
    %v26 = vsel %vm24, %v14, 0
    %28 = vmatprep.subr.mxu0 0.0
    %29 = vmatpush1.msra.mxu0 0.0
    %30 = vmatprep.subr.mxu0 0.0
    %31 = vmatpush1.msra.mxu0 0.0
    %32 = vmatprep.subr.mxu0 0.0
    %33 = vmatpush1.msra.mxu0 0.0
    %34 = vmatprep.subr.mxu0 0.0
    %35 = vmatpush1.msra.mxu0 0.0
    %36 = vmatprep.subr.mxu0 0.0
    %37 = vmatpush1.msra.mxu0 0.0
    %38 = vmatprep.subr.mxu0 0.0
    %39 = vmatpush1.msra.mxu0 0.0
    %40 = vmatprep.subr.mxu0 0.0
    %41 = vmatpush1.msra.mxu0 0.0
    %42 = vmatprep.subr.mxu0 0.0
    %43 = vmatpush1.msra.mxu0 0.0
    %44 = vmatprep.subr.mxu0 0.0
    %45 = vmatpush1.msra.mxu0 0.0
    %46 = vmatprep.subr.mxu0 0.0
    %47 = vmatpush1.msra.mxu0 0.0
    %48 = vmatprep.subr.mxu0 0.0
    %49 = vmatpush1.msra.mxu0 0.0
    %50 = vmatprep.subr.mxu0 0.0
    %51 = vmatpush1.msra.mxu0 0.0
    %52 = vmatprep.subr.mxu0 0.0
    %53 = vmatpush1.msra.mxu0 0.0
    %54 = vmatprep.subr.mxu0 0.0
    %55 = vmatpush1.msra.mxu0 0.0
    %56 = vmatprep.subr.mxu0 0.0
    %57 = vmatpush1.msra.mxu0 0.0
    %58 = vmatprep.subr.mxu0 0.0
    %59 = vmatpush1.msra.mxu0 %v26
    %60 = vmatprep.subr.mxu0 0.0
    %61 = vmatpush2.msra.mxu0 0.0
    %62 = vmatprep.subr.mxu0 0.0
    %63 = vmatpush2.msra.mxu0 0.0
    %64 = vmatprep.subr.mxu0 0.0
    %65 = vmatpush2.msra.mxu0 0.0
    %66 = vmatprep.subr.mxu0 0.0
    %67 = vmatpush2.msra.mxu0 0.0
    %68 = vmatprep.subr.mxu0 0.0
    %69 = vmatpush2.msra.mxu0 0.0
    %70 = vmatprep.subr.mxu0 0.0
    %71 = vmatpush2.msra.mxu0 0.0
    %72 = vmatprep.subr.mxu0 0.0
    %73 = vmatpush2.msra.mxu0 0.0
    %74 = vmatprep.subr.mxu0 0.0
    %75 = vmatpush2.msra.mxu0 0.0
    %76 = vmatprep.subr.mxu0 0.0
    %77 = vmatpush2.msra.mxu0 0.0
    %78 = vmatprep.subr.mxu0 0.0
    %79 = vmatpush2.msra.mxu0 0.0
    %80 = vmatprep.subr.mxu0 0.0
    %81 = vmatpush2.msra.mxu0 0.0
    %82 = vmatprep.subr.mxu0 0.0
    %83 = vmatpush2.msra.mxu0 0.0
    %84 = vmatprep.subr.mxu0 0.0
    %85 = vmatpush2.msra.mxu0 0.0
    %86 = vmatprep.subr.mxu0 0.0
    %87 = vmatpush2.msra.mxu0 0.0
    %88 = vmatprep.subr.mxu0 0.0
    %89 = vmatpush2.msra.mxu0 0.0
    %90 = vmatprep.subr.mxu0 0.0
    %91 = vmatpush2.msra.mxu0 0.0
    %92 = vmatprep.mubr.f32.mxu0 0.0
    %93 = vmatmul.mubr.f32.gmra.mxu0 %v19
    %v94 = vpop.f32.mrf.mxu0
    %v95 = vadd.f32 0.0, %v94
    %v96 = vpop.f32.mrf.mxu0
    %97 = vmatprep.mubr.f32.mxu0 0.0
    %98 = vmatmul.mubr.f32.gmra.mxu0 %v22
    %v99 = vpop.f32.mrf.mxu0
    %v100 = vadd.f32 0.0, %v99
    %v101 = vpop.f32.mrf.mxu0
    %102 = vdwg.mxu0
    %v103 = vmul.f32 %v14, %v14
    %v104 = vsel %vm24, %v103, 0.0
    %v105 = vrot.slane %v104, 4
    %v106 = vadd.f32 %v104, %v105
    %v107 = vrot.slane %v106, 2
    %v108 = vadd.f32 %v106, %v107
    %v109 = vrot.slane %v108, 1
    %v110 = vadd.f32 %v108, %v109
    %v111 = vmul.f32 %v15, %v15
    %v112 = vmul.f32 %v16, %v16
    %v113 = vsel %vm17, %v111, 0.0
    %114 = vadd.xlane.f32.xlu0 %v113
    %v115 = vpop.xlane.xlu0 %114
    %v116 = vsel %vm17, %v112, 0.0
    %117 = vadd.xlane.f32.xlu0 %v116
    %v118 = vpop.xlane.xlu0 %117
    %v119 = vadd.f32 %v110, %v115
    %v120 = vadd.f32 %v110, %v118
    %v121 = vmul.f32 %v95, 2.0
    %v122 = vmul.f32 %v100, 2.0
    %v123 = vsub.f32 %v119, %v121
    %v124 = vsub.f32 %v120, %v122
    %v125 = vlaneseq
    %v126 = vshrl.u32 %v125, 7
    %v127 = vadd.s32 %v126, 8
    %v128 = vmin.f32 %v123, %v124
    %v129 = vrot.slane %v128, 4
    %v130 = vmin.f32 %v128, %v129
    %v131 = vrot.slane %v130, 2
    %v132 = vmin.f32 %v130, %v131
    %v133 = vrot.slane %v132, 1
    %v134 = vmin.f32 %v132, %v133
    %vm135 = vcmp.eq.f32.partialorder %v123, %v134
    %vm136 = vcmp.eq.f32.partialorder %v124, %v134
    %v137 = vsel %vm135, %v126, 16
    %v138 = vsel %vm136, %v127, 16
    %vm139 = vcmp.lt.s32.totalorder %v137, %v138
    %v140 = vsel %vm139, %v137, %v138
    %v141 = vrot.slane %v140, 4
    %vm142 = vcmp.lt.s32.totalorder %v140, %v141
    %v143 = vsel %vm142, %v140, %v141
    %v144 = vrot.slane %v143, 2
    %vm145 = vcmp.lt.s32.totalorder %v143, %v144
    %v146 = vsel %vm145, %v143, %v144
    %v147 = vrot.slane %v146, 1
    %vm148 = vcmp.lt.s32.totalorder %v146, %v147
    %v149 = vsel %vm148, %v146, %v147
    %vm150 = vcmp.eq.s32.totalorder %v126, %v149
    %vm151 = vcmp.eq.s32.totalorder %v127, %v149
    %v152 = vsel %vm150, 1, 0
    %v153 = vsel %vm151, 1, 0
    %v154 = vcvt.s32.f32 %v152
    %v155 = vcvt.s32.f32 %v153
    %156 = vxpose.xlu0.b32.start [1/16] %v15, 128
    %157 = vxpose.xlu0.b32.cont [2/16] %v16, 128
    %158 = vxpose.xlu0.b32.cont [3/16] 0.0, 128
    %159 = vxpose.xlu0.b32.cont [4/16] 0.0, 128
    %160 = vxpose.xlu0.b32.cont [5/16] 0.0, 128
    %161 = vxpose.xlu0.b32.cont [6/16] 0.0, 128
    %162 = vxpose.xlu0.b32.cont [7/16] 0.0, 128
    %163 = vxpose.xlu0.b32.cont [8/16] 0.0, 128
    %164 = vxpose.xlu0.b32.cont [9/16] 0.0, 128
    %165 = vxpose.xlu0.b32.cont [10/16] 0.0, 128
    %166 = vxpose.xlu0.b32.cont [11/16] 0.0, 128
    %167 = vxpose.xlu0.b32.cont [12/16] 0.0, 128
    %168 = vxpose.xlu0.b32.cont [13/16] 0.0, 128
    %169 = vxpose.xlu0.b32.cont [14/16] 0.0, 128
    %170 = vxpose.xlu0.b32.cont [15/16] 0.0, 128
    %171 = vxpose.xlu0.b32.end [16/16] 0.0, 128
    %v172 = vpop.trf.xlu0
    %v173 = vpop.trf.xlu0
    %v174 = vpop.trf.xlu0
    %v175 = vpop.trf.xlu0
    %v176 = vpop.trf.xlu0
    %v177 = vpop.trf.xlu0
    %v178 = vpop.trf.xlu0
    %v179 = vpop.trf.xlu0
    %v180 = vpop.trf.xlu0
    %v181 = vpop.trf.xlu0
    %v182 = vpop.trf.xlu0
    %v183 = vpop.trf.xlu0
    %v184 = vpop.trf.xlu0
    %v185 = vpop.trf.xlu0
    %v186 = vpop.trf.xlu0
    %v187 = vpop.trf.xlu0
    %vm188 = vcmask 130048
    %v190 = vsel %vm188, %v172, 0
    %192 = vmatprep.subr.mxu0 0.0
    %193 = vmatpush1.msra.mxu0 0.0
    %194 = vmatprep.subr.mxu0 0.0
    %195 = vmatpush1.msra.mxu0 0.0
    %196 = vmatprep.subr.mxu0 0.0
    %197 = vmatpush1.msra.mxu0 0.0
    %198 = vmatprep.subr.mxu0 0.0
    %199 = vmatpush1.msra.mxu0 0.0
    %200 = vmatprep.subr.mxu0 0.0
    %201 = vmatpush1.msra.mxu0 0.0
    %202 = vmatprep.subr.mxu0 0.0
    %203 = vmatpush1.msra.mxu0 0.0
    %204 = vmatprep.subr.mxu0 0.0
    %205 = vmatpush1.msra.mxu0 0.0
    %206 = vmatprep.subr.mxu0 0.0
    %207 = vmatpush1.msra.mxu0 0.0
    %208 = vmatprep.subr.mxu0 0.0
    %209 = vmatpush1.msra.mxu0 0.0
    %210 = vmatprep.subr.mxu0 0.0
    %211 = vmatpush1.msra.mxu0 0.0
    %212 = vmatprep.subr.mxu0 0.0
    %213 = vmatpush1.msra.mxu0 0.0
    %214 = vmatprep.subr.mxu0 0.0
    %215 = vmatpush1.msra.mxu0 0.0
    %216 = vmatprep.subr.mxu0 0.0
    %217 = vmatpush1.msra.mxu0 0.0
    %218 = vmatprep.subr.mxu0 0.0
    %219 = vmatpush1.msra.mxu0 0.0
    %220 = vmatprep.subr.mxu0 0.0
    %221 = vmatpush1.msra.mxu0 %v155
    %222 = vmatprep.subr.mxu0 0.0
    %223 = vmatpush1.msra.mxu0 %v154
    %224 = vmatprep.subr.mxu0 0.0
    %225 = vmatpush2.msra.mxu0 0.0
    %226 = vmatprep.subr.mxu0 0.0
    %227 = vmatpush2.msra.mxu0 0.0
    %228 = vmatprep.subr.mxu0 0.0
    %229 = vmatpush2.msra.mxu0 0.0
    %230 = vmatprep.subr.mxu0 0.0
    %231 = vmatpush2.msra.mxu0 0.0
    %232 = vmatprep.subr.mxu0 0.0
    %233 = vmatpush2.msra.mxu0 0.0
    %234 = vmatprep.subr.mxu0 0.0
    %235 = vmatpush2.msra.mxu0 0.0
    %236 = vmatprep.subr.mxu0 0.0
    %237 = vmatpush2.msra.mxu0 0.0
    %238 = vmatprep.subr.mxu0 0.0
    %239 = vmatpush2.msra.mxu0 0.0
    %240 = vmatprep.subr.mxu0 0.0
    %241 = vmatpush2.msra.mxu0 0.0
    %242 = vmatprep.subr.mxu0 0.0
    %243 = vmatpush2.msra.mxu0 0.0
    %244 = vmatprep.subr.mxu0 0.0
    %245 = vmatpush2.msra.mxu0 0.0
    %246 = vmatprep.subr.mxu0 0.0
    %247 = vmatpush2.msra.mxu0 0.0
    %248 = vmatprep.subr.mxu0 0.0
    %249 = vmatpush2.msra.mxu0 0.0
    %250 = vmatprep.subr.mxu0 0.0
    %251 = vmatpush2.msra.mxu0 0.0
    %252 = vmatprep.subr.mxu0 0.0
    %253 = vmatpush2.msra.mxu0 0.0
    %254 = vmatprep.subr.mxu0 0.0
    %255 = vmatpush2.msra.mxu0 0.0
    %256 = vmatprep.mubr.f32.mxu0 0.0
    %257 = vmatmul.mubr.f32.gmra.mxu0 %v190
    %v258 = vpop.f32.mrf.mxu0
    %v259 = vadd.f32 0.0, %v258
    %v260 = vpop.f32.mrf.mxu0
    %261 = vdwg.mxu0
    %v262 = vpack.c.bf16 %v259, %v259
    %263 = vst [vmem:[%s2] sm:$0x3] %v262
    %v264 = vsub.f32 %v259, %v14
    %v265 = vmul.f32 %v264, %v264
    %v266 = vsel %vm24, %v265, 0.0
    %267 = vadd.xlane.f32.xlu0 %v266
    %v268 = vpop.xlane.xlu0 %267
    %v269 = vrot.slane %v268, 4
    %v270 = vadd.f32 %v268, %v269
    %v271 = vrot.slane %v270, 2
    %v272 = vadd.f32 %v270, %v271
    %v273 = vrot.slane %v272, 1
    %v274 = vadd.f32 %v272, %v273
    %s275 = vtos %v274
    %s276 = scalar_lea.smem [#allocation2], 0
    %277 = sst [smem:[%s276]] %s275
    // Predicated region
    $region10: #{vqvae_forward.10} parent=1 // pred_check
      _
    $region11: #{vqvae_forward.10} parent=1 // pred_check_branch
      %279 = sbr.rel (0) target = $region13
    $region12: #{vqvae_forward.10} parent=1 // pred_region
      _
    $region13: #{vqvae_forward.10} parent=1 // pred_fallthru
      _
    // Predicated region
    $region14: #{vqvae_forward.10} parent=1 // pred_check
      _
    $region15: #{vqvae_forward.10} parent=1 // pred_check_branch
      %281 = sbr.rel (0) target = $region17
    $region16: #{vqvae_forward.10} parent=1 // pred_region
      %s283 = ssub.s32 16, 16
      %284 = vsyncadd [#allocation3], %s283
      %287 = dma.smem_to_hbm [#allocation2], 16, %s3, [#allocation3]
    $region17: #{vqvae_forward.10} parent=1 // pred_fallthru
      _
    // Predicated region
    $region18: #{vqvae_forward.10} parent=1 // pred_check
      _
    $region19: #{vqvae_forward.10} parent=1 // pred_check_branch
      %289 = sbr.rel (0) target = $region21
    $region20: #{vqvae_forward.10} parent=1 // pred_region
      _
    $region21: #{vqvae_forward.10} parent=1 // pred_fallthru
      _
    // Predicated region
    $region22: #{vqvae_forward.10} parent=1 // pred_check
      _
    $region23: #{vqvae_forward.10} parent=1 // pred_check_branch
      %291 = sbr.rel (0) target = $region25
    $region24: #{vqvae_forward.10} parent=1 // pred_region
      %292 = dma.done [#allocation3], 16
    $region25: #{vqvae_forward.10} parent=1 // pred_fallthru
      _
    %293 = sfence
    %294 = vsyncpa [#allocation3], 1

// kernel: vqvae_forward.9
$region0: #{vqvae_forward.9}
  #allocation0 [shape = 'u32[]', space=smem, size = 0x4, offset = 0x4, fixed_abs, tag = 'smem constant byte address 0x4 - core index']
  #allocation1 [shape = 'u32[144,128]{1,0:T(1,128)}', space=vmem, size = 0x12000, scoped, tag = 'internal scratch']
  %s0 = inlined_call_operand.vmem [shape: bf16[160,128], index: 0, kind: input, shape index: {}]
  %s1 = inlined_call_operand.vmem [shape: bf16[4,160], index: 1, kind: input, shape index: {}]
  %s2 = inlined_call_operand.vmem [shape: f32[4,1], index: 2, kind: input, shape index: {}]
  %s3 = inlined_call_operand.vmem [shape: f32[4,1], index: 3, kind: input, shape index: {}]
  %s4 = inlined_call_operand.vmem [shape: f32[4,128], index: 4, kind: output, shape index: {}]
  %s5 = sld [smem:[#allocation0]]
  $region26: #{vqvae_forward.9} parent=0
    _
  %s7 = ssub.s32 1, %s5
  %s8 = scalar_select 0, %s7, %s5
  // Predicated region
  $region2: #{vqvae_forward.9} parent=0 // pred_check
    _
  $region3: #{vqvae_forward.9} parent=0 // pred_check_branch
    %10 = sbr.rel (0) target = $region5
  $region4: #{vqvae_forward.9} parent=0 // pred_region
    _
  $region5: #{vqvae_forward.9} parent=0 // pred_fallthru
    _
  // Predicated region
  $region6: #{vqvae_forward.9} parent=0 // pred_check
    _
  $region7: #{vqvae_forward.9} parent=0 // pred_check_branch
    %12 = sbr.rel (0) target = $region9
  $region8: #{vqvae_forward.9} parent=0 // pred_region
    _
  $region9: #{vqvae_forward.9} parent=0 // pred_fallthru
    _
  // Predicated region
  $region10: #{vqvae_forward.9} parent=0 // pred_check
    _
  $region11: #{vqvae_forward.9} parent=0 // pred_check_branch
    %14 = sbr.rel (0) target = $region13
  $region12: #{vqvae_forward.9} parent=0 // pred_region
    _
  $region13: #{vqvae_forward.9} parent=0 // pred_fallthru
    _
  // Predicated region
  $region14: #{vqvae_forward.9} parent=0 // pred_check
    _
  $region15: #{vqvae_forward.9} parent=0 // pred_check_branch
    %16 = sbr.rel (0) target = $region17
  $region16: #{vqvae_forward.9} parent=0 // pred_region
    _
  $region17: #{vqvae_forward.9} parent=0 // pred_fallthru
    _
  %v18 = vld [vmem:[%s1] sm:$0xf]
  %v19 = vld [vmem:[%s0] sm:$0xf]
  %v20 = vld [vmem:[%s0 + $0x4] sm:$0xf]
  %v21 = vld [vmem:[%s0 + $0x8] sm:$0xf]
  %v22 = vld [vmem:[%s0 + $0xc] sm:$0xf]
  %v23 = vld [vmem:[%s0 + $0x10] sm:$0xf]
  %v24 = vld [vmem:[%s0 + $0x14] sm:$0xf]
  %v25 = vld [vmem:[%s0 + $0x18] sm:$0xf]
  %v26 = vld [vmem:[%s0 + $0x1c] sm:$0xf]
  %v27 = vld [vmem:[%s0 + $0x20] sm:$0xf]
  %v28 = vld [vmem:[%s0 + $0x24] sm:$0xf]
  %v29 = vld [vmem:[%s0 + $0x28] sm:$0xf]
  %v30 = vld [vmem:[%s0 + $0x2c] sm:$0xf]
  %v31 = vld [vmem:[%s0 + $0x30] sm:$0xf]
  %v32 = vld [vmem:[%s0 + $0x34] sm:$0xf]
  %v33 = vld [vmem:[%s0 + $0x38] sm:$0xf]
  %v34 = vld [vmem:[%s0 + $0x3c] sm:$0xf]
  %v35 = vld [vmem:[%s0 + $0x40] sm:$0xf]
  %v36 = vld [vmem:[%s0 + $0x44] sm:$0xf]
  %v37 = vld [vmem:[%s0 + $0x48] sm:$0xf]
  %v38 = vld [vmem:[%s0 + $0x4c] sm:$0xf]
  %v41 = vunpack.c.l.s4 1983009808
  %v42 = vunpack.c.0.s8 %v41
  %v43 = vlaneseq
  %v44 = vshrl.u32 %v43, 7
  %v45 = vsub.s32 %v42, %v44
  %v46 = vrot.slane %v18, %v45
  %v47 = vcombine.high %v46, %v46
  %v69 = vunpack.c.l.b16 %v19
  %v70 = vunpack.c.l.b16 %v20
  %v71 = vunpack.c.l.b16 %v21
  %v72 = vunpack.c.l.b16 %v22
  %v73 = vunpack.c.l.b16 %v23
  %v74 = vunpack.c.l.b16 %v24
  %v75 = vunpack.c.l.b16 %v25
  %v76 = vunpack.c.l.b16 %v26
  %v77 = vunpack.c.l.b16 %v27
  %v78 = vunpack.c.l.b16 %v28
  %v79 = vunpack.c.l.b16 %v29
  %v80 = vunpack.c.l.b16 %v30
  %v81 = vunpack.c.l.b16 %v31
  %v82 = vunpack.c.l.b16 %v32
  %v83 = vunpack.c.l.b16 %v33
  %v84 = vunpack.c.l.b16 %v34
  %v85 = vunpack.c.l.b16 %v35
  %v86 = vunpack.c.l.b16 %v36
  %v87 = vunpack.c.l.b16 %v37
  %v88 = vunpack.c.l.b16 %v38
  %v89 = vpack.c.b16 %v70, %v69
  %v90 = vpack.c.b16 %v72, %v71
  %v91 = vpack.c.b16 %v74, %v73
  %v92 = vpack.c.b16 %v76, %v75
  %v93 = vpack.c.b16 %v78, %v77
  %v94 = vpack.c.b16 %v80, %v79
  %v95 = vpack.c.b16 %v82, %v81
  %v96 = vpack.c.b16 %v84, %v83
  %v97 = vpack.c.b16 %v86, %v85
  %v98 = vpack.c.b16 %v88, %v87
  %vm109 = vcmask 261120
  %v111 = vsel %vm109, %v47, 0
  %113 = vmatprep.subr.bf16.mxu0 0
  %114 = vmatpush1.bf16.msra.mxu0 %v96
  %115 = vmatprep.subr.bf16.mxu0 0
  %116 = vmatpush1.bf16.msra.mxu0 %v95
  %117 = vmatprep.subr.bf16.mxu0 0
  %118 = vmatpush1.bf16.msra.mxu0 %v94
  %119 = vmatprep.subr.bf16.mxu0 0
  %120 = vmatpush1.bf16.msra.mxu0 %v93
  %121 = vmatprep.subr.bf16.mxu0 0
  %122 = vmatpush1.bf16.msra.mxu0 %v92
  %123 = vmatprep.subr.bf16.mxu0 0
  %124 = vmatpush1.bf16.msra.mxu0 %v91
  %125 = vmatprep.subr.bf16.mxu0 0
  %126 = vmatpush1.bf16.msra.mxu0 %v90
  %127 = vmatprep.subr.bf16.mxu0 0
  %128 = vmatpush1.bf16.msra.mxu0 %v89
  %129 = vmatprep.subr.bf16.mxu0 0
  %130 = vmatpush2.bf16.msra.mxu0 0
  %131 = vmatprep.subr.bf16.mxu0 0
  %132 = vmatpush2.bf16.msra.mxu0 0
  %133 = vmatprep.subr.bf16.mxu0 0
  %134 = vmatpush2.bf16.msra.mxu0 0
  %135 = vmatprep.subr.bf16.mxu0 0
  %136 = vmatpush2.bf16.msra.mxu0 0
  %137 = vmatprep.subr.bf16.mxu0 0
  %138 = vmatpush2.bf16.msra.mxu0 0
  %139 = vmatprep.subr.bf16.mxu0 0
  %140 = vmatpush2.bf16.msra.mxu0 0
  %141 = vmatprep.subr.bf16.mxu0 0
  %142 = vmatpush2.bf16.msra.mxu0 %v98
  %143 = vmatprep.subr.bf16.mxu0 0
  %144 = vmatpush2.bf16.msra.mxu0 %v97
  %145 = vmatprep.mubr.bf16.mxu0 %v111
  %146 = vmatmul.mubr.bf16.gmra.mxu0 %v46
  %v147 = vpop.f32.mrf.mxu0
  %v148 = vadd.f32 0.0, %v147
  %v149 = vpop.f32.mrf.mxu0
  %v150 = vpop.f32.mrf.mxu0
  %v151 = vpop.f32.mrf.mxu0
  %152 = vdwg.mxu0
  %vm153 = vcmask 1043456
  %v154 = vsel %vm153, %v148, 0.0
  %155 = vadd.xlane.f32.xlu0 %v154
  %v156 = vpop.xlane.xlu0 %155
  %v157 = vrcp.pop 128.0
  %v158 = vmul.f32 %v156, %v157
  %v159 = vsub.f32 %v148, %v158
  %v160 = vmul.f32 %v159, %v159
  %v161 = vsel %vm153, %v160, 0.0
  %162 = vadd.xlane.f32.xlu0 %v161
  %v163 = vpop.xlane.xlu0 %162
  %v164 = vmul.f32 %v163, %v157
  %v165 = vld [vmem:[%s2] sm:$0xf]
  %v166 = vadd.f32 %v164, 1e-05
  %v167 = vrsqrt.pop %v166
  %v168 = vmul.f32 %v165, %v167
  %170 = vset.pattern.permute.xlu0 0
  %171 = vperm.xlu0 %170, %v168
  %v172 = vpop.permute.xlu0 %171
  %v174 = vmul.f32 %v159, %v172
  %v175 = vld [vmem:[%s3] sm:$0xf]
  %177 = vset.pattern.permute.xlu0 0
  %178 = vperm.xlu0 %177, %v175
  %v179 = vpop.permute.xlu0 %178
  %v181 = vadd.f32 %v174, %v179
  %v182 = vmax.f32 %v181, 0.0
  %183 = vst [vmem:[%s4] sm:$0xf] %v182
  // Predicated region
  $region18: #{vqvae_forward.9} parent=0 // pred_check
    _
  $region19: #{vqvae_forward.9} parent=0 // pred_check_branch
    %185 = sbr.rel (0) target = $region21
  $region20: #{vqvae_forward.9} parent=0 // pred_region
    _
  $region21: #{vqvae_forward.9} parent=0 // pred_fallthru
    _
  // Predicated region
  $region22: #{vqvae_forward.9} parent=0 // pred_check
    _
  $region23: #{vqvae_forward.9} parent=0 // pred_check_branch
    %187 = sbr.rel (0) target = $region25
  $region24: #{vqvae_forward.9} parent=0 // pred_region
    _
  $region25: #{vqvae_forward.9} parent=0 // pred_fallthru
    _

// kernel: vqvae_forward.11
$region0: #{vqvae_forward.11}
  #allocation0 [shape = 'u32[]', space=smem, size = 0x4, offset = 0x4, fixed_abs, tag = 'smem constant byte address 0x4 - core index']
  #allocation1 [shape = 'u32[144,128]{1,0:T(1,128)}', space=vmem, size = 0x12000, scoped, tag = 'internal scratch']
  %s0 = inlined_call_operand.vmem [shape: bf16[48,128], index: 0, kind: input, shape index: {}]
  %s1 = inlined_call_operand.vmem [shape: bf16[16,48], index: 1, kind: input, shape index: {}]
  %s2 = inlined_call_operand.vmem [shape: f32[16,1], index: 2, kind: input, shape index: {}]
  %s3 = inlined_call_operand.vmem [shape: f32[16,1], index: 3, kind: input, shape index: {}]
  %s4 = inlined_call_operand.vmem [shape: bf16[16,128], index: 4, kind: output, shape index: {}]
  %s5 = sld [smem:[#allocation0]]
  $region26: #{vqvae_forward.11} parent=0
    _
  %s7 = ssub.s32 1, %s5
  %s8 = scalar_select 0, %s7, %s5
  // Predicated region
  $region2: #{vqvae_forward.11} parent=0 // pred_check
    _
  $region3: #{vqvae_forward.11} parent=0 // pred_check_branch
    %10 = sbr.rel (0) target = $region5
  $region4: #{vqvae_forward.11} parent=0 // pred_region
    _
  $region5: #{vqvae_forward.11} parent=0 // pred_fallthru
    _
  // Predicated region
  $region6: #{vqvae_forward.11} parent=0 // pred_check
    _
  $region7: #{vqvae_forward.11} parent=0 // pred_check_branch
    %12 = sbr.rel (0) target = $region9
  $region8: #{vqvae_forward.11} parent=0 // pred_region
    _
  $region9: #{vqvae_forward.11} parent=0 // pred_fallthru
    _
  // Predicated region
  $region10: #{vqvae_forward.11} parent=0 // pred_check
    _
  $region11: #{vqvae_forward.11} parent=0 // pred_check_branch
    %14 = sbr.rel (0) target = $region13
  $region12: #{vqvae_forward.11} parent=0 // pred_region
    _
  $region13: #{vqvae_forward.11} parent=0 // pred_fallthru
    _
  // Predicated region
  $region14: #{vqvae_forward.11} parent=0 // pred_check
    _
  $region15: #{vqvae_forward.11} parent=0 // pred_check_branch
    %16 = sbr.rel (0) target = $region17
  $region16: #{vqvae_forward.11} parent=0 // pred_region
    _
  $region17: #{vqvae_forward.11} parent=0 // pred_fallthru
    _
  %v18 = vld [vmem:[%s1] sm:$0xf]
  %v19 = vld [vmem:[%s1 + $0x4] sm:$0xf]
  %v20 = vld [vmem:[%s0] sm:$0xf]
  %v21 = vld [vmem:[%s0 + $0x4] sm:$0xf]
  %v22 = vld [vmem:[%s0 + $0x8] sm:$0xf]
  %v23 = vld [vmem:[%s0 + $0xc] sm:$0xf]
  %v24 = vld [vmem:[%s0 + $0x10] sm:$0xf]
  %v25 = vld [vmem:[%s0 + $0x14] sm:$0xf]
  %v28 = vunpack.c.l.b16 %v18
  %v29 = vunpack.c.l.b16 %v19
  %v30 = vpack.c.b16 %v29, %v28
  %v37 = vunpack.c.l.b16 %v20
  %v38 = vunpack.c.l.b16 %v21
  %v39 = vunpack.c.l.b16 %v22
  %v40 = vunpack.c.l.b16 %v23
  %v41 = vunpack.c.l.b16 %v24
  %v42 = vunpack.c.l.b16 %v25
  %v43 = vpack.c.b16 %v38, %v37
  %v44 = vpack.c.b16 %v40, %v39
  %v45 = vpack.c.b16 %v42, %v41
  %vm49 = vcmask 392192
  %v51 = vsel %vm49, %v30, 0
  %53 = vmatprep.subr.bf16.mxu0 0
  %54 = vmatpush1.bf16.msra.mxu0 0
  %55 = vmatprep.subr.bf16.mxu0 0
  %56 = vmatpush1.bf16.msra.mxu0 0
  %57 = vmatprep.subr.bf16.mxu0 0
  %58 = vmatpush1.bf16.msra.mxu0 0
  %59 = vmatprep.subr.bf16.mxu0 0
  %60 = vmatpush1.bf16.msra.mxu0 0
  %61 = vmatprep.subr.bf16.mxu0 0
  %62 = vmatpush1.bf16.msra.mxu0 0
  %63 = vmatprep.subr.bf16.mxu0 0
  %64 = vmatpush1.bf16.msra.mxu0 %v45
  %65 = vmatprep.subr.bf16.mxu0 0
  %66 = vmatpush1.bf16.msra.mxu0 %v44
  %67 = vmatprep.subr.bf16.mxu0 0
  %68 = vmatpush1.bf16.msra.mxu0 %v43
  %69 = vmatprep.subr.bf16.mxu0 0
  %70 = vmatpush2.bf16.msra.mxu0 0
  %71 = vmatprep.subr.bf16.mxu0 0
  %72 = vmatpush2.bf16.msra.mxu0 0
  %73 = vmatprep.subr.bf16.mxu0 0
  %74 = vmatpush2.bf16.msra.mxu0 0
  %75 = vmatprep.subr.bf16.mxu0 0
  %76 = vmatpush2.bf16.msra.mxu0 0
  %77 = vmatprep.subr.bf16.mxu0 0
  %78 = vmatpush2.bf16.msra.mxu0 0
  %79 = vmatprep.subr.bf16.mxu0 0
  %80 = vmatpush2.bf16.msra.mxu0 0
  %81 = vmatprep.subr.bf16.mxu0 0
  %82 = vmatpush2.bf16.msra.mxu0 0
  %83 = vmatprep.subr.bf16.mxu0 0
  %84 = vmatpush2.bf16.msra.mxu0 0
  %85 = vmatprep.mubr.bf16.mxu0 0
  %86 = vmatmul.mubr.bf16.gmra.mxu0 %v51
  %v87 = vpop.f32.mrf.mxu0
  %v88 = vadd.f32 0.0, %v87
  %v89 = vpop.f32.mrf.mxu0
  %v90 = vpop.f32.mrf.mxu0
  %v91 = vadd.f32 0.0, %v90
  %v92 = vpop.f32.mrf.mxu0
  %93 = vdwg.mxu0
  %94 = vadd.xlane.f32.xlu0 %v88
  %v95 = vpop.xlane.xlu0 %94
  %96 = vadd.xlane.f32.xlu0 %v91
  %v97 = vpop.xlane.xlu0 %96
  %v98 = vrcp.pop 128.0
  %v99 = vmul.f32 %v95, %v98
  %v100 = vmul.f32 %v97, %v98
  %v101 = vsub.f32 %v88, %v99
  %v102 = vsub.f32 %v91, %v100
  %v103 = vmul.f32 %v101, %v101
  %v104 = vmul.f32 %v102, %v102
  %105 = vadd.xlane.f32.xlu0 %v103
  %v106 = vpop.xlane.xlu0 %105
  %107 = vadd.xlane.f32.xlu0 %v104
  %v108 = vpop.xlane.xlu0 %107
  %v109 = vmul.f32 %v106, %v98
  %v110 = vmul.f32 %v108, %v98
  %v111 = vld [vmem:[%s2] sm:$0xff]
  %v112 = vld [vmem:[%s2 + $0x8] sm:$0xff]
  %v113 = vadd.f32 %v109, 1e-05
  %v114 = vadd.f32 %v110, 1e-05
  %v115 = vrsqrt.pop %v113
  %v116 = vrsqrt.pop %v114
  %v117 = vmul.f32 %v111, %v115
  %v118 = vmul.f32 %v112, %v116
  %120 = vset.pattern.permute.xlu0 0
  %121 = vperm.xlu0 %120, %v117
  %v122 = vpop.permute.xlu0 %121
  %125 = vset.pattern.permute.xlu0 0
  %126 = vperm.xlu0 %125, %v118
  %v127 = vpop.permute.xlu0 %126
  %v129 = vmul.f32 %v101, %v122
  %v130 = vmul.f32 %v102, %v127
  %v131 = vld [vmem:[%s3] sm:$0xff]
  %v132 = vld [vmem:[%s3 + $0x8] sm:$0xff]
  %134 = vset.pattern.permute.xlu0 0
  %135 = vperm.xlu0 %134, %v131
  %v136 = vpop.permute.xlu0 %135
  %139 = vset.pattern.permute.xlu0 0
  %140 = vperm.xlu0 %139, %v132
  %v141 = vpop.permute.xlu0 %140
  %v143 = vadd.f32 %v129, %v136
  %v144 = vadd.f32 %v130, %v141
  %v145 = vmax.f32 %v143, 0.0
  %v146 = vmax.f32 %v144, 0.0
  %v147 = vpack.c.bf16 %v146, %v145
  %v149 = vunpack.c.l.b16 %v147
  %v150 = vunpack.c.h.b16 %v147
  %v151 = vpack.c.b16 %v149, %v149
  %v152 = vpack.c.b16 %v150, %v150
  %155 = vst [vmem:[%s4] sm:$0xf] %v151
  %156 = vst [vmem:[%s4 + $0x4] sm:$0xf] %v152
  // Predicated region
  $region18: #{vqvae_forward.11} parent=0 // pred_check
    _
  $region19: #{vqvae_forward.11} parent=0 // pred_check_branch
    %158 = sbr.rel (0) target = $region21
  $region20: #{vqvae_forward.11} parent=0 // pred_region
    _
  $region21: #{vqvae_forward.11} parent=0 // pred_fallthru
    _
  // Predicated region
  $region22: #{vqvae_forward.11} parent=0 // pred_check
    _
  $region23: #{vqvae_forward.11} parent=0 // pred_check_branch
    %160 = sbr.rel (0) target = $region25
  $region24: #{vqvae_forward.11} parent=0 // pred_region
    _
  $region25: #{vqvae_forward.11} parent=0 // pred_fallthru
    _

// kernel: vqvae_forward.12
$region0: #{vqvae_forward.12}
  #allocation0 [shape = 'u32[]', space=smem, size = 0x4, offset = 0x4, fixed_abs, tag = 'smem constant byte address 0x4 - core index']
  #allocation1 [shape = 'u32[144,128]{1,0:T(1,128)}', space=vmem, size = 0x12000, scoped, tag = 'internal scratch']
  %s0 = inlined_call_operand.vmem [shape: bf16[160,512], index: 0, kind: input, shape index: {}]
  %s1 = inlined_call_operand.vmem [shape: bf16[8,160], index: 1, kind: input, shape index: {}]
  %s2 = inlined_call_operand.vmem [shape: f32[8,1], index: 2, kind: input, shape index: {}]
  %s3 = inlined_call_operand.vmem [shape: f32[8,1], index: 3, kind: input, shape index: {}]
  %s4 = inlined_call_operand.vmem [shape: bf16[8,512], index: 4, kind: output, shape index: {}]
  %s5 = sld [smem:[#allocation0]]
  $region26: #{vqvae_forward.12} parent=0
    _
  %s7 = ssub.s32 1, %s5
  %s8 = scalar_select 0, %s7, %s5
  // Predicated region
  $region2: #{vqvae_forward.12} parent=0 // pred_check
    _
  $region3: #{vqvae_forward.12} parent=0 // pred_check_branch
    %10 = sbr.rel (0) target = $region5
  $region4: #{vqvae_forward.12} parent=0 // pred_region
    _
  $region5: #{vqvae_forward.12} parent=0 // pred_fallthru
    _
  // Predicated region
  $region6: #{vqvae_forward.12} parent=0 // pred_check
    _
  $region7: #{vqvae_forward.12} parent=0 // pred_check_branch
    %12 = sbr.rel (0) target = $region9
  $region8: #{vqvae_forward.12} parent=0 // pred_region
    _
  $region9: #{vqvae_forward.12} parent=0 // pred_fallthru
    _
  // Predicated region
  $region10: #{vqvae_forward.12} parent=0 // pred_check
    _
  $region11: #{vqvae_forward.12} parent=0 // pred_check_branch
    %14 = sbr.rel (0) target = $region13
  $region12: #{vqvae_forward.12} parent=0 // pred_region
    _
  $region13: #{vqvae_forward.12} parent=0 // pred_fallthru
    _
  // Predicated region
  $region14: #{vqvae_forward.12} parent=0 // pred_check
    _
  $region15: #{vqvae_forward.12} parent=0 // pred_check_branch
    %16 = sbr.rel (0) target = $region17
  $region16: #{vqvae_forward.12} parent=0 // pred_region
    _
  $region17: #{vqvae_forward.12} parent=0 // pred_fallthru
    _
  %v18 = vld [vmem:[%s1] sm:$0xff]
  %v19 = vld [vmem:[%s0] sm:$0xff]
  %v20 = vld [vmem:[%s0 + $0x8] sm:$0xff]
  %v21 = vld [vmem:[%s0 + $0x10] sm:$0xff]
  %v22 = vld [vmem:[%s0 + $0x18] sm:$0xff]
  %v23 = vld [vmem:[%s0 + $0x20] sm:$0xff]
  %v24 = vld [vmem:[%s0 + $0x28] sm:$0xff]
  %v25 = vld [vmem:[%s0 + $0x30] sm:$0xff]
  %v26 = vld [vmem:[%s0 + $0x38] sm:$0xff]
  %v27 = vld [vmem:[%s0 + $0x40] sm:$0xff]
  %v28 = vld [vmem:[%s0 + $0x48] sm:$0xff]
  %v29 = vld [vmem:[%s0 + $0x50] sm:$0xff]
  %v30 = vld [vmem:[%s0 + $0x58] sm:$0xff]
  %v31 = vld [vmem:[%s0 + $0x60] sm:$0xff]
  %v32 = vld [vmem:[%s0 + $0x68] sm:$0xff]
  %v33 = vld [vmem:[%s0 + $0x70] sm:$0xff]
  %v34 = vld [vmem:[%s0 + $0x78] sm:$0xff]
  %v35 = vld [vmem:[%s0 + $0x80] sm:$0xff]
  %v36 = vld [vmem:[%s0 + $0x88] sm:$0xff]
  %v37 = vld [vmem:[%s0 + $0x90] sm:$0xff]
  %v38 = vld [vmem:[%s0 + $0x98] sm:$0xff]
  %v39 = vld [vmem:[%s0 + $0xa0] sm:$0xff]
  %v40 = vld [vmem:[%s0 + $0xa8] sm:$0xff]
  %v41 = vld [vmem:[%s0 + $0xb0] sm:$0xff]
  %v42 = vld [vmem:[%s0 + $0xb8] sm:$0xff]
  %v43 = vld [vmem:[%s0 + $0xc0] sm:$0xff]
  %v44 = vld [vmem:[%s0 + $0xc8] sm:$0xff]
  %v45 = vld [vmem:[%s0 + $0xd0] sm:$0xff]
  %v46 = vld [vmem:[%s0 + $0xd8] sm:$0xff]
  %v47 = vld [vmem:[%s0 + $0xe0] sm:$0xff]
  %v48 = vld [vmem:[%s0 + $0xe8] sm:$0xff]
  %v49 = vld [vmem:[%s0 + $0xf0] sm:$0xff]
  %v50 = vld [vmem:[%s0 + $0xf8] sm:$0xff]
  %v51 = vld [vmem:[%s0 + $0x100] sm:$0xff]
  %v52 = vld [vmem:[%s0 + $0x108] sm:$0xff]
  %v53 = vld [vmem:[%s0 + $0x110] sm:$0xff]
  %v54 = vld [vmem:[%s0 + $0x118] sm:$0xff]
  %v55 = vld [vmem:[%s0 + $0x120] sm:$0xff]
  %v56 = vld [vmem:[%s0 + $0x128] sm:$0xff]
  %v57 = vld [vmem:[%s0 + $0x130] sm:$0xff]
  %v58 = vld [vmem:[%s0 + $0x138] sm:$0xff]
  %v60 = vunpack.c.l.b16 %v18
  %v61 = vunpack.c.h.b16 %v18
  %v62 = vpack.c.b16 %v60, %v60
  %v63 = vpack.c.b16 %v61, %v61
  %v105 = vunpack.c.l.b16 %v19
  %v106 = vunpack.c.h.b16 %v19
  %v107 = vunpack.c.l.b16 %v20
  %v108 = vunpack.c.h.b16 %v20
  %v109 = vunpack.c.l.b16 %v21
  %v110 = vunpack.c.h.b16 %v21
  %v111 = vunpack.c.l.b16 %v22
  %v112 = vunpack.c.h.b16 %v22
  %v113 = vunpack.c.l.b16 %v23
  %v114 = vunpack.c.h.b16 %v23
  %v115 = vunpack.c.l.b16 %v24
  %v116 = vunpack.c.h.b16 %v24
  %v117 = vunpack.c.l.b16 %v25
  %v118 = vunpack.c.h.b16 %v25
  %v119 = vunpack.c.l.b16 %v26
  %v120 = vunpack.c.h.b16 %v26
  %v121 = vunpack.c.l.b16 %v27
  %v122 = vunpack.c.h.b16 %v27
  %v123 = vunpack.c.l.b16 %v28
  %v124 = vunpack.c.h.b16 %v28
  %v125 = vunpack.c.l.b16 %v29
  %v126 = vunpack.c.h.b16 %v29
  %v127 = vunpack.c.l.b16 %v30
  %v128 = vunpack.c.h.b16 %v30
  %v129 = vunpack.c.l.b16 %v31
  %v130 = vunpack.c.h.b16 %v31
  %v131 = vunpack.c.l.b16 %v32
  %v132 = vunpack.c.h.b16 %v32
  %v133 = vunpack.c.l.b16 %v33
  %v134 = vunpack.c.h.b16 %v33
  %v135 = vunpack.c.l.b16 %v34
  %v136 = vunpack.c.h.b16 %v34
  %v137 = vunpack.c.l.b16 %v35
  %v138 = vunpack.c.h.b16 %v35
  %v139 = vunpack.c.l.b16 %v36
  %v140 = vunpack.c.h.b16 %v36
  %v141 = vunpack.c.l.b16 %v37
  %v142 = vunpack.c.h.b16 %v37
  %v143 = vunpack.c.l.b16 %v38
  %v144 = vunpack.c.h.b16 %v38
  %v145 = vunpack.c.l.b16 %v39
  %v146 = vunpack.c.h.b16 %v39
  %v147 = vunpack.c.l.b16 %v40
  %v148 = vunpack.c.h.b16 %v40
  %v149 = vunpack.c.l.b16 %v41
  %v150 = vunpack.c.h.b16 %v41
  %v151 = vunpack.c.l.b16 %v42
  %v152 = vunpack.c.h.b16 %v42
  %v153 = vunpack.c.l.b16 %v43
  %v154 = vunpack.c.h.b16 %v43
  %v155 = vunpack.c.l.b16 %v44
  %v156 = vunpack.c.h.b16 %v44
  %v157 = vunpack.c.l.b16 %v45
  %v158 = vunpack.c.h.b16 %v45
  %v159 = vunpack.c.l.b16 %v46
  %v160 = vunpack.c.h.b16 %v46
  %v161 = vunpack.c.l.b16 %v47
  %v162 = vunpack.c.h.b16 %v47
  %v163 = vunpack.c.l.b16 %v48
  %v164 = vunpack.c.h.b16 %v48
  %v165 = vunpack.c.l.b16 %v49
  %v166 = vunpack.c.h.b16 %v49
  %v167 = vunpack.c.l.b16 %v50
  %v168 = vunpack.c.h.b16 %v50
  %v169 = vunpack.c.l.b16 %v51
  %v170 = vunpack.c.h.b16 %v51
  %v171 = vunpack.c.l.b16 %v52
  %v172 = vunpack.c.h.b16 %v52
  %v173 = vunpack.c.l.b16 %v53
  %v174 = vunpack.c.h.b16 %v53
  %v175 = vunpack.c.l.b16 %v54
  %v176 = vunpack.c.h.b16 %v54
  %v177 = vunpack.c.l.b16 %v55
  %v178 = vunpack.c.h.b16 %v55
  %v179 = vunpack.c.l.b16 %v56
  %v180 = vunpack.c.h.b16 %v56
  %v181 = vunpack.c.l.b16 %v57
  %v182 = vunpack.c.h.b16 %v57
  %v183 = vunpack.c.l.b16 %v58
  %v184 = vunpack.c.h.b16 %v58
  %v185 = vpack.c.b16 %v109, %v105
  %v186 = vpack.c.b16 %v110, %v106
  %v187 = vpack.c.b16 %v111, %v107
  %v188 = vpack.c.b16 %v112, %v108
  %v189 = vpack.c.b16 %v117, %v113
  %v190 = vpack.c.b16 %v118, %v114
  %v191 = vpack.c.b16 %v119, %v115
  %v192 = vpack.c.b16 %v120, %v116
  %v193 = vpack.c.b16 %v125, %v121
  %v194 = vpack.c.b16 %v126, %v122
  %v195 = vpack.c.b16 %v127, %v123
  %v196 = vpack.c.b16 %v128, %v124
  %v197 = vpack.c.b16 %v133, %v129
  %v198 = vpack.c.b16 %v134, %v130
  %v199 = vpack.c.b16 %v135, %v131
  %v200 = vpack.c.b16 %v136, %v132
  %v201 = vpack.c.b16 %v141, %v137
  %v202 = vpack.c.b16 %v142, %v138
  %v203 = vpack.c.b16 %v143, %v139
  %v204 = vpack.c.b16 %v144, %v140
  %v205 = vpack.c.b16 %v149, %v145
  %v206 = vpack.c.b16 %v150, %v146
  %v207 = vpack.c.b16 %v151, %v147
  %v208 = vpack.c.b16 %v152, %v148
  %v209 = vpack.c.b16 %v157, %v153
  %v210 = vpack.c.b16 %v158, %v154
  %v211 = vpack.c.b16 %v159, %v155
  %v212 = vpack.c.b16 %v160, %v156
  %v213 = vpack.c.b16 %v165, %v161
  %v214 = vpack.c.b16 %v166, %v162
  %v215 = vpack.c.b16 %v167, %v163
  %v216 = vpack.c.b16 %v168, %v164
  %v217 = vpack.c.b16 %v173, %v169
  %v218 = vpack.c.b16 %v174, %v170
  %v219 = vpack.c.b16 %v175, %v171
  %v220 = vpack.c.b16 %v176, %v172
  %v221 = vpack.c.b16 %v181, %v177
  %v222 = vpack.c.b16 %v182, %v178
  %v223 = vpack.c.b16 %v183, %v179
  %v224 = vpack.c.b16 %v184, %v180
  %vm265 = vcmask 261120
  %v267 = vsel %vm265, %v63, 0
  %269 = vmatprep.subr.bf16.mxu0 %v214
  %270 = vmatpush1.bf16.msra.mxu0 %v213
  %271 = vmatprep.subr.bf16.mxu0 %v210
  %272 = vmatpush1.bf16.msra.mxu0 %v209
  %273 = vmatprep.subr.bf16.mxu0 %v206
  %274 = vmatpush1.bf16.msra.mxu0 %v205
  %275 = vmatprep.subr.bf16.mxu0 %v202
  %276 = vmatpush1.bf16.msra.mxu0 %v201
  %277 = vmatprep.subr.bf16.mxu0 %v198
  %278 = vmatpush1.bf16.msra.mxu0 %v197
  %279 = vmatprep.subr.bf16.mxu0 %v194
  %280 = vmatpush1.bf16.msra.mxu0 %v193
  %281 = vmatprep.subr.bf16.mxu0 %v190
  %282 = vmatpush1.bf16.msra.mxu0 %v189
  %283 = vmatprep.subr.bf16.mxu0 %v186
  %284 = vmatpush1.bf16.msra.mxu0 %v185
  %285 = vmatprep.subr.bf16.mxu0 0
  %286 = vmatpush2.bf16.msra.mxu0 0
  %287 = vmatprep.subr.bf16.mxu0 0
  %288 = vmatpush2.bf16.msra.mxu0 0
  %289 = vmatprep.subr.bf16.mxu0 0
  %290 = vmatpush2.bf16.msra.mxu0 0
  %291 = vmatprep.subr.bf16.mxu0 0
  %292 = vmatpush2.bf16.msra.mxu0 0
  %293 = vmatprep.subr.bf16.mxu0 0
  %294 = vmatpush2.bf16.msra.mxu0 0
  %295 = vmatprep.subr.bf16.mxu0 0
  %296 = vmatpush2.bf16.msra.mxu0 0
  %297 = vmatprep.subr.bf16.mxu0 %v222
  %298 = vmatpush2.bf16.msra.mxu0 %v221
  %299 = vmatprep.subr.bf16.mxu0 %v218
  %300 = vmatpush2.bf16.msra.mxu0 %v217
  %301 = vmatprep.mubr.bf16.mxu0 %v267
  %302 = vmatmul.mubr.bf16.gmra.mxu0 %v62
  %v303 = vpop.f32.mrf.mxu0
  %v304 = vadd.f32 0.0, %v303
  %v305 = vpop.f32.mrf.mxu0
  %v306 = vadd.f32 0.0, %v305
  %v307 = vpop.f32.mrf.mxu0
  %v308 = vpop.f32.mrf.mxu0
  %309 = vdwg.mxu0
  %310 = vmatprep.subr.bf16.mxu0 %v216
  %311 = vmatpush1.bf16.msra.mxu0 %v215
  %312 = vmatprep.subr.bf16.mxu0 %v212
  %313 = vmatpush1.bf16.msra.mxu0 %v211
  %314 = vmatprep.subr.bf16.mxu0 %v208
  %315 = vmatpush1.bf16.msra.mxu0 %v207
  %316 = vmatprep.subr.bf16.mxu0 %v204
  %317 = vmatpush1.bf16.msra.mxu0 %v203
  %318 = vmatprep.subr.bf16.mxu0 %v200
  %319 = vmatpush1.bf16.msra.mxu0 %v199
  %320 = vmatprep.subr.bf16.mxu0 %v196
  %321 = vmatpush1.bf16.msra.mxu0 %v195
  %322 = vmatprep.subr.bf16.mxu0 %v192
  %323 = vmatpush1.bf16.msra.mxu0 %v191
  %324 = vmatprep.subr.bf16.mxu0 %v188
  %325 = vmatpush1.bf16.msra.mxu0 %v187
  %326 = vmatprep.subr.bf16.mxu0 0
  %327 = vmatpush2.bf16.msra.mxu0 0
  %328 = vmatprep.subr.bf16.mxu0 0
  %329 = vmatpush2.bf16.msra.mxu0 0
  %330 = vmatprep.subr.bf16.mxu0 0
  %331 = vmatpush2.bf16.msra.mxu0 0
  %332 = vmatprep.subr.bf16.mxu0 0
  %333 = vmatpush2.bf16.msra.mxu0 0
  %334 = vmatprep.subr.bf16.mxu0 0
  %335 = vmatpush2.bf16.msra.mxu0 0
  %336 = vmatprep.subr.bf16.mxu0 0
  %337 = vmatpush2.bf16.msra.mxu0 0
  %338 = vmatprep.subr.bf16.mxu0 %v224
  %339 = vmatpush2.bf16.msra.mxu0 %v223
  %340 = vmatprep.subr.bf16.mxu0 %v220
  %341 = vmatpush2.bf16.msra.mxu0 %v219
  %342 = vmatprep.mubr.bf16.mxu0 %v267
  %343 = vmatmul.mubr.bf16.gmra.mxu0 %v62
  %v344 = vpop.f32.mrf.mxu0
  %v345 = vadd.f32 0.0, %v344
  %v346 = vpop.f32.mrf.mxu0
  %v347 = vadd.f32 0.0, %v346
  %v348 = vpop.f32.mrf.mxu0
  %v349 = vpop.f32.mrf.mxu0
  %350 = vdwg.mxu0
  %v351 = vadd.f32 %v304, %v306
  %v352 = vadd.f32 %v351, %v345
  %v353 = vadd.f32 %v352, %v347
  %354 = vadd.xlane.f32.xlu0 %v353
  %v355 = vpop.xlane.xlu0 %354
  %v356 = vrcp.pop 512.0
  %v357 = vmul.f32 %v355, %v356
  %v358 = vsub.f32 %v304, %v357
  %v359 = vsub.f32 %v306, %v357
  %v360 = vsub.f32 %v345, %v357
  %v361 = vsub.f32 %v347, %v357
  %v362 = vmul.f32 %v358, %v358
  %v363 = vmul.f32 %v359, %v359
  %v364 = vmul.f32 %v360, %v360
  %v365 = vmul.f32 %v361, %v361
  %v366 = vadd.f32 %v362, %v363
  %v367 = vadd.f32 %v366, %v364
  %v368 = vadd.f32 %v367, %v365
  %369 = vadd.xlane.f32.xlu0 %v368
  %v370 = vpop.xlane.xlu0 %369
  %v371 = vmul.f32 %v370, %v356
  %v372 = vld [vmem:[%s2] sm:$0xff]
  %v373 = vadd.f32 %v371, 1e-05
  %v374 = vrsqrt.pop %v373
  %v375 = vmul.f32 %v372, %v374
  %377 = vset.pattern.permute.xlu0 0
  %378 = vperm.xlu0 %377, %v375
  %v379 = vpop.permute.xlu0 %378
  %v381 = vmul.f32 %v358, %v379
  %v382 = vmul.f32 %v359, %v379
  %v383 = vmul.f32 %v360, %v379
  %v384 = vmul.f32 %v361, %v379
  %v385 = vld [vmem:[%s3] sm:$0xff]
  %387 = vset.pattern.permute.xlu0 0
  %388 = vperm.xlu0 %387, %v385
  %v389 = vpop.permute.xlu0 %388
  %v391 = vadd.f32 %v381, %v389
  %v392 = vadd.f32 %v382, %v389
  %v393 = vadd.f32 %v383, %v389
  %v394 = vadd.f32 %v384, %v389
  %v395 = vmax.f32 %v391, 0.0
  %v396 = vmax.f32 %v392, 0.0
  %v397 = vmax.f32 %v393, 0.0
  %v398 = vmax.f32 %v394, 0.0
  %v399 = vpack.c.bf16 %v395, %v395
  %v400 = vpack.c.bf16 %v396, %v396
  %v401 = vpack.c.bf16 %v397, %v397
  %v402 = vpack.c.bf16 %v398, %v398
  %v407 = vunpack.c.l.b16 %v399
  %v408 = vunpack.c.l.b16 %v400
  %v409 = vunpack.c.l.b16 %v401
  %v410 = vunpack.c.l.b16 %v402
  %v411 = vpack.c.b16 %v408, %v407
  %v412 = vpack.c.b16 %v410, %v409
  %415 = vst [vmem:[%s4] sm:$0xff] %v411
  %416 = vst [vmem:[%s4 + $0x8] sm:$0xff] %v412
  // Predicated region
  $region18: #{vqvae_forward.12} parent=0 // pred_check
    _
  $region19: #{vqvae_forward.12} parent=0 // pred_check_branch
    %418 = sbr.rel (0) target = $region21
  $region20: #{vqvae_forward.12} parent=0 // pred_region
    _
  $region21: #{vqvae_forward.12} parent=0 // pred_fallthru
    _
  // Predicated region
  $region22: #{vqvae_forward.12} parent=0 // pred_check
    _
  $region23: #{vqvae_forward.12} parent=0 // pred_check_branch
    %420 = sbr.rel (0) target = $region25
  $region24: #{vqvae_forward.12} parent=0 // pred_region
    _
  $region25: #{vqvae_forward.12} parent=0 // pred_fallthru
    _

// kernel: vqvae_forward.13
$region0: #{vqvae_forward.13}
  #allocation0 [shape = 'u32[]', space=smem, size = 0x4, offset = 0x4, fixed_abs, tag = 'smem constant byte address 0x4 - core index']
  #allocation1 [shape = 'u32[144,128]{1,0:T(1,128)}', space=vmem, size = 0x12000, scoped, tag = 'internal scratch']
  %s0 = inlined_call_operand.vmem [shape: bf16[80,512], index: 0, kind: input, shape index: {}]
  %s1 = inlined_call_operand.vmem [shape: bf16[3,80], index: 1, kind: input, shape index: {}]
  %s2 = inlined_call_operand.vmem [shape: f32[3,512], index: 2, kind: output, shape index: {}]
  %s3 = sld [smem:[#allocation0]]
  $region18: #{vqvae_forward.13} parent=0
    _
  %s5 = ssub.s32 1, %s3
  %s6 = scalar_select 0, %s5, %s3
  // Predicated region
  $region2: #{vqvae_forward.13} parent=0 // pred_check
    _
  $region3: #{vqvae_forward.13} parent=0 // pred_check_branch
    %8 = sbr.rel (0) target = $region5
  $region4: #{vqvae_forward.13} parent=0 // pred_region
    _
  $region5: #{vqvae_forward.13} parent=0 // pred_fallthru
    _
  // Predicated region
  $region6: #{vqvae_forward.13} parent=0 // pred_check
    _
  $region7: #{vqvae_forward.13} parent=0 // pred_check_branch
    %10 = sbr.rel (0) target = $region9
  $region8: #{vqvae_forward.13} parent=0 // pred_region
    _
  $region9: #{vqvae_forward.13} parent=0 // pred_fallthru
    _
  %v12 = vld [vmem:[%s1] sm:$0x3]
  %v13 = vld [vmem:[%s0] sm:$0xff]
  %v14 = vld [vmem:[%s0 + $0x8] sm:$0xff]
  %v15 = vld [vmem:[%s0 + $0x10] sm:$0xff]
  %v16 = vld [vmem:[%s0 + $0x18] sm:$0xff]
  %v17 = vld [vmem:[%s0 + $0x20] sm:$0xff]
  %v18 = vld [vmem:[%s0 + $0x28] sm:$0xff]
  %v19 = vld [vmem:[%s0 + $0x30] sm:$0xff]
  %v20 = vld [vmem:[%s0 + $0x38] sm:$0xff]
  %v21 = vld [vmem:[%s0 + $0x40] sm:$0xff]
  %v22 = vld [vmem:[%s0 + $0x48] sm:$0xff]
  %v23 = vld [vmem:[%s0 + $0x50] sm:$0xff]
  %v24 = vld [vmem:[%s0 + $0x58] sm:$0xff]
  %v25 = vld [vmem:[%s0 + $0x60] sm:$0xff]
  %v26 = vld [vmem:[%s0 + $0x68] sm:$0xff]
  %v27 = vld [vmem:[%s0 + $0x70] sm:$0xff]
  %v28 = vld [vmem:[%s0 + $0x78] sm:$0xff]
  %v29 = vld [vmem:[%s0 + $0x80] sm:$0xff]
  %v30 = vld [vmem:[%s0 + $0x88] sm:$0xff]
  %v31 = vld [vmem:[%s0 + $0x90] sm:$0xff]
  %v32 = vld [vmem:[%s0 + $0x98] sm:$0xff]
  %v53 = vunpack.c.l.b16 %v13
  %v54 = vunpack.c.h.b16 %v13
  %v55 = vunpack.c.l.b16 %v14
  %v56 = vunpack.c.h.b16 %v14
  %v57 = vunpack.c.l.b16 %v15
  %v58 = vunpack.c.h.b16 %v15
  %v59 = vunpack.c.l.b16 %v16
  %v60 = vunpack.c.h.b16 %v16
  %v61 = vunpack.c.l.b16 %v17
  %v62 = vunpack.c.h.b16 %v17
  %v63 = vunpack.c.l.b16 %v18
  %v64 = vunpack.c.h.b16 %v18
  %v65 = vunpack.c.l.b16 %v19
  %v66 = vunpack.c.h.b16 %v19
  %v67 = vunpack.c.l.b16 %v20
  %v68 = vunpack.c.h.b16 %v20
  %v69 = vunpack.c.l.b16 %v21
  %v70 = vunpack.c.h.b16 %v21
  %v71 = vunpack.c.l.b16 %v22
  %v72 = vunpack.c.h.b16 %v22
  %v73 = vunpack.c.l.b16 %v23
  %v74 = vunpack.c.h.b16 %v23
  %v75 = vunpack.c.l.b16 %v24
  %v76 = vunpack.c.h.b16 %v24
  %v77 = vunpack.c.l.b16 %v25
  %v78 = vunpack.c.h.b16 %v25
  %v79 = vunpack.c.l.b16 %v26
  %v80 = vunpack.c.h.b16 %v26
  %v81 = vunpack.c.l.b16 %v27
  %v82 = vunpack.c.h.b16 %v27
  %v83 = vunpack.c.l.b16 %v28
  %v84 = vunpack.c.h.b16 %v28
  %v85 = vunpack.c.l.b16 %v29
  %v86 = vunpack.c.h.b16 %v29
  %v87 = vunpack.c.l.b16 %v30
  %v88 = vunpack.c.h.b16 %v30
  %v89 = vunpack.c.l.b16 %v31
  %v90 = vunpack.c.h.b16 %v31
  %v91 = vunpack.c.l.b16 %v32
  %v92 = vunpack.c.h.b16 %v32
  %v93 = vpack.c.b16 %v57, %v53
  %v94 = vpack.c.b16 %v58, %v54
  %v95 = vpack.c.b16 %v59, %v55
  %v96 = vpack.c.b16 %v60, %v56
  %v97 = vpack.c.b16 %v65, %v61
  %v98 = vpack.c.b16 %v66, %v62
  %v99 = vpack.c.b16 %v67, %v63
  %v100 = vpack.c.b16 %v68, %v64
  %v101 = vpack.c.b16 %v73, %v69
  %v102 = vpack.c.b16 %v74, %v70
  %v103 = vpack.c.b16 %v75, %v71
  %v104 = vpack.c.b16 %v76, %v72
  %v105 = vpack.c.b16 %v81, %v77
  %v106 = vpack.c.b16 %v82, %v78
  %v107 = vpack.c.b16 %v83, %v79
  %v108 = vpack.c.b16 %v84, %v80
  %v109 = vpack.c.b16 %v89, %v85
  %v110 = vpack.c.b16 %v90, %v86
  %v111 = vpack.c.b16 %v91, %v87
  %v112 = vpack.c.b16 %v92, %v88
  %vm133 = vcmask 654336
  %v135 = vsel %vm133, %v12, 0
  %137 = vmatprep.subr.bf16.mxu0 0
  %138 = vmatpush1.bf16.msra.mxu0 0
  %139 = vmatprep.subr.bf16.mxu0 0
  %140 = vmatpush1.bf16.msra.mxu0 0
  %141 = vmatprep.subr.bf16.mxu0 0
  %142 = vmatpush1.bf16.msra.mxu0 0
  %143 = vmatprep.subr.bf16.mxu0 %v110
  %144 = vmatpush1.bf16.msra.mxu0 %v109
  %145 = vmatprep.subr.bf16.mxu0 %v106
  %146 = vmatpush1.bf16.msra.mxu0 %v105
  %147 = vmatprep.subr.bf16.mxu0 %v102
  %148 = vmatpush1.bf16.msra.mxu0 %v101
  %149 = vmatprep.subr.bf16.mxu0 %v98
  %150 = vmatpush1.bf16.msra.mxu0 %v97
  %151 = vmatprep.subr.bf16.mxu0 %v94
  %152 = vmatpush1.bf16.msra.mxu0 %v93
  %153 = vmatprep.subr.bf16.mxu0 0
  %154 = vmatpush2.bf16.msra.mxu0 0
  %155 = vmatprep.subr.bf16.mxu0 0
  %156 = vmatpush2.bf16.msra.mxu0 0
  %157 = vmatprep.subr.bf16.mxu0 0
  %158 = vmatpush2.bf16.msra.mxu0 0
  %159 = vmatprep.subr.bf16.mxu0 0
  %160 = vmatpush2.bf16.msra.mxu0 0
  %161 = vmatprep.subr.bf16.mxu0 0
  %162 = vmatpush2.bf16.msra.mxu0 0
  %163 = vmatprep.subr.bf16.mxu0 0
  %164 = vmatpush2.bf16.msra.mxu0 0
  %165 = vmatprep.subr.bf16.mxu0 0
  %166 = vmatpush2.bf16.msra.mxu0 0
  %167 = vmatprep.subr.bf16.mxu0 0
  %168 = vmatpush2.bf16.msra.mxu0 0
  %169 = vmatprep.mubr.bf16.mxu0 0
  %170 = vmatmul.mubr.bf16.gmra.mxu0 %v135
  %v171 = vpop.f32.mrf.mxu0
  %v172 = vadd.f32 0.0, %v171
  %v173 = vpop.f32.mrf.mxu0
  %v174 = vadd.f32 0.0, %v173
  %v175 = vpop.f32.mrf.mxu0
  %v176 = vpop.f32.mrf.mxu0
  %177 = vdwg.mxu0
  %178 = vmatprep.subr.bf16.mxu0 0
  %179 = vmatpush1.bf16.msra.mxu0 0
  %180 = vmatprep.subr.bf16.mxu0 0
  %181 = vmatpush1.bf16.msra.mxu0 0
  %182 = vmatprep.subr.bf16.mxu0 0
  %183 = vmatpush1.bf16.msra.mxu0 0
  %184 = vmatprep.subr.bf16.mxu0 %v112
  %185 = vmatpush1.bf16.msra.mxu0 %v111
  %186 = vmatprep.subr.bf16.mxu0 %v108
  %187 = vmatpush1.bf16.msra.mxu0 %v107
  %188 = vmatprep.subr.bf16.mxu0 %v104
  %189 = vmatpush1.bf16.msra.mxu0 %v103
  %190 = vmatprep.subr.bf16.mxu0 %v100
  %191 = vmatpush1.bf16.msra.mxu0 %v99
  %192 = vmatprep.subr.bf16.mxu0 %v96
  %193 = vmatpush1.bf16.msra.mxu0 %v95
  %194 = vmatprep.subr.bf16.mxu0 0
  %195 = vmatpush2.bf16.msra.mxu0 0
  %196 = vmatprep.subr.bf16.mxu0 0
  %197 = vmatpush2.bf16.msra.mxu0 0
  %198 = vmatprep.subr.bf16.mxu0 0
  %199 = vmatpush2.bf16.msra.mxu0 0
  %200 = vmatprep.subr.bf16.mxu0 0
  %201 = vmatpush2.bf16.msra.mxu0 0
  %202 = vmatprep.subr.bf16.mxu0 0
  %203 = vmatpush2.bf16.msra.mxu0 0
  %204 = vmatprep.subr.bf16.mxu0 0
  %205 = vmatpush2.bf16.msra.mxu0 0
  %206 = vmatprep.subr.bf16.mxu0 0
  %207 = vmatpush2.bf16.msra.mxu0 0
  %208 = vmatprep.subr.bf16.mxu0 0
  %209 = vmatpush2.bf16.msra.mxu0 0
  %210 = vmatprep.mubr.bf16.mxu0 0
  %211 = vmatmul.mubr.bf16.gmra.mxu0 %v135
  %v212 = vpop.f32.mrf.mxu0
  %v213 = vadd.f32 0.0, %v212
  %v214 = vpop.f32.mrf.mxu0
  %v215 = vadd.f32 0.0, %v214
  %v216 = vpop.f32.mrf.mxu0
  %v217 = vpop.f32.mrf.mxu0
  %218 = vdwg.mxu0
  %v219 = vxor.u32 %v172, 2147483648
  %v220 = vxor.u32 %v174, 2147483648
  %v221 = vxor.u32 %v213, 2147483648
  %v222 = vxor.u32 %v215, 2147483648
  %v223 = vmul.f32 %v219, 1.442695
  %v224 = vpow.pop %v223
  %v225 = vmul.f32 %v220, 1.442695
  %v226 = vpow.pop %v225
  %v227 = vmul.f32 %v221, 1.442695
  %v228 = vpow.pop %v227
  %v229 = vmul.f32 %v222, 1.442695
  %v230 = vpow.pop %v229
  %v231 = vadd.f32 %v224, 1.0
  %v232 = vadd.f32 %v226, 1.0
  %v233 = vadd.f32 %v228, 1.0
  %v234 = vadd.f32 %v230, 1.0
  %v235 = vrcp.pop %v231
  %v236 = vmul.f32 1.0, %v235
  %v237 = vrcp.pop %v232
  %v238 = vmul.f32 1.0, %v237
  %v239 = vrcp.pop %v233
  %v240 = vmul.f32 1.0, %v239
  %v241 = vrcp.pop %v234
  %v242 = vmul.f32 1.0, %v241
  %v247 = vcombine.low %v236, %v238
  %v248 = vcombine.low %v240, %v242
  %251 = vst [vmem:[%s2] sm:$0x77] %v247
  %252 = vst [vmem:[%s2 + $0x8] sm:$0x77] %v248
  // Predicated region
  $region10: #{vqvae_forward.13} parent=0 // pred_check
    _
  $region11: #{vqvae_forward.13} parent=0 // pred_check_branch
    %254 = sbr.rel (0) target = $region13
  $region12: #{vqvae_forward.13} parent=0 // pred_region
    _
  $region13: #{vqvae_forward.13} parent=0 // pred_fallthru
    _
  // Predicated region
  $region14: #{vqvae_forward.13} parent=0 // pred_check
    _
  $region15: #{vqvae_forward.13} parent=0 // pred_check_branch
    %256 = sbr.rel (0) target = $region17
  $region16: #{vqvae_forward.13} parent=0 // pred_region
    _
  $region17: #{vqvae_forward.13} parent=0 // pred_fallthru
    _

</llo_original>
